<compile_context>
chip_gen: v6e
topology: v6e:2x2x1
jax: 0.10.0
libtpu: 0.0.40
codegen_flags: <defaults>
</compile_context>

<pallas_src>
import numpy as np
import jax
import jax.numpy as jnp
from jax.experimental import pallas as pl
from jax.experimental.pallas import tpu as pltpu


# ----------------------------------------------------------------------------
# Deterministic host-side "parameters" (what RadarData.__init__ builds).
# ----------------------------------------------------------------------------
def chebwin(M: int, at: float) -> np.ndarray:
    """Dolph-Chebyshev window (same algorithm as scipy.signal.windows.chebwin)."""
    if M == 1:
        return np.ones(1, dtype=np.float64)
    order = M - 1.0
    beta = np.cosh(1.0 / order * np.arccosh(10 ** (np.abs(at) / 20.0)))
    k = np.arange(M)
    x = beta * np.cos(np.pi * k / M)
    p = np.zeros(M, dtype=np.float64)
    p[x > 1] = np.cosh(order * np.arccosh(x[x > 1]))
    p[x < -1] = (2 * (M % 2) - 1) * np.cosh(order * np.arccosh(-x[x < -1]))
    sel = np.abs(x) <= 1
    p[sel] = np.cos(order * np.arccos(x[sel]))
    if M % 2:
        w = np.real(np.fft.fft(p))
        n = (M + 1) // 2
        w = w[:n]
        w = np.concatenate((w[n - 1:0:-1], w))
    else:
        pc = p * np.exp(1j * np.pi / M * np.arange(M))
        w = np.real(np.fft.fft(pc))
        n = M // 2 + 1
        w = np.concatenate((w[n - 1:0:-1], w[1:n]))
    return w / np.max(w)


def dft_matrix(n_in: int, n_fft: int) -> np.ndarray:
    """DFT matrix equivalent to fft(x, n=n_fft) along an axis of length n_in."""
    n = np.arange(n_in)[:, None]
    k = np.arange(n_fft)[None, :]
    return np.exp(-2j * np.pi * n * k / n_fft)


def _pick_block_batch(B: int, G: int, A: int, m_target: int = 256) -> int:
    """Largest Bt dividing B with the dominant matmul M = Bt*G <= 256.

    No minimum-step constraint: for tiny B one fat step beats starved steps
    (per-step overhead ~0.35us); for large B there are still multiple steps
    so the "parallel" grid axis can shard across v7x's two TensorCores.
    Blocks must keep the (8,128) sublane tiling legal: Bt*G and Bt*A must be
    multiples of 8, unless Bt == B (block == full array, always legal).
    """
    best = B  # block == full array: always a legal fallback
    for bt in range(1, B + 1):
        if B % bt:
            continue
        if bt * G > max(m_target, G):
            continue
        if (bt * G) % 8 == 0 and (bt * A) % 8 == 0:
            best = bt
    return best


# ----------------------------------------------------------------------------
# Pallas kernel: fused 2D-DFT + phase comp + angle DFT for Bt batch elements.
# ----------------------------------------------------------------------------
def _make_kernel(Bt, G, A, cdt):
    f32 = jnp.float32

    def kernel(x_re_ref, x_im_ref,
               w2_re_ref, w2_im_ref, w2_sum_ref,
               p_re_ref, p_im_ref,
               wa_re_ref, wa_im_ref, wa_sum_ref,
               o_re_ref, o_im_ref):
        # Inputs arrive pre-flattened: (Bt*G, CS) — no in-kernel reshape.
        xr = x_re_ref[...]
        xi = x_im_ref[...]

        # ---- fused range+doppler 2D DFT ----------------------------------
        # conj(x) @ W2D; conjugation folded into the sign pattern, complex
        # product done with the 3-matmul Gauss form:
        #   (a - ib)(c + id): rr = a@c + b@d ; ri = (a-b)@(c+d) - a@c + b@d
        t1 = jnp.dot(xr, w2_re_ref[...], preferred_element_type=f32)
        t2 = jnp.dot(xi, w2_im_ref[...], preferred_element_type=f32)
        t3 = jnp.dot(xr - xi, w2_sum_ref[...], preferred_element_type=f32)
        yr = t1 + t2                       # (Bt*G, DR), f32
        yi = t3 - t1 + t2

        # ---- TDM-MIMO phase compensation (pre-broadcast plane, pure VPU, f32)
        pr = p_re_ref[...]
        pi = p_im_ref[...]
        cr = yr * pr - yi * pi
        ci = yr * pi + yi * pr

        # ---- angle DFT: per-batch-block (A,G)@(G,DR) matmuls --------------
        # Statically unrolled loop (== lax.fori_loop(..., unroll=True)); each
        # iteration's values are sunk straight into lane-dense output stores,
        # so live ranges stay bounded.  G-aligned slices are sublane-aligned.
        war = wa_re_ref[...]               # (A, G)
        wai = wa_im_ref[...]
        was = wa_sum_ref[...]
        for b in range(Bt):
            crb_f = cr[b * G:(b + 1) * G, :]          # (G, DR) f32
            cib_f = ci[b * G:(b + 1) * G, :]
            crb = crb_f.astype(cdt)
            cib = cib_f.astype(cdt)
            csum = (crb_f + cib_f).astype(cdt)
            # (a + ib)(c + id): rr = a@c - b@d ; ri = (a+b)@(c+d) - a@c - b@d
            u1 = jnp.dot(war, crb, preferred_element_type=f32)
            u2 = jnp.dot(wai, cib, preferred_element_type=f32)
            u3 = jnp.dot(was, csum, preferred_element_type=f32)
            o_re_ref[b * A:(b + 1) * A, :] = u1 - u2
            o_im_ref[b * A:(b + 1) * A, :] = u3 - u1 - u2

    return kernel


# ----------------------------------------------------------------------------
# Wrapper (glue): parameter setup + pallas_call.
# ----------------------------------------------------------------------------
def radar_3dfft(x, raw_shape, fft_shape, *, block_batch=None,
                compute_dtype=jnp.float32):
    """Radar 3D-FFT.  Returns (out_re, out_im) f32 planes of shape (B, A, D, R).

    The two planes are the public output (avoids an extra full-HBM pass to
    build complex64; consumers can `lax.complex` them if needed).
    """
    TX, RX, C, S = raw_shape
    A, D, R = fft_shape
    B = x.shape[0]
    G, CS, DR = TX * RX, C * S, D * R

    Bt = _pick_block_batch(B, G, A) if block_batch is None else block_batch
    assert B % Bt == 0, "block_batch must divide the batch size"
    steps = B // Bt

    # ---- host-side parameters -------------------------------------------
    rw = chebwin(S, 80)
    dw = chebwin(C, 60)
    aw = chebwin(G, 50)
    Wr = rw[:, None] * dft_matrix(S, R)                    # (S, R)  range (windowed)
    Wd = dw[:, None] * dft_matrix(C, D)                    # (C, D)  doppler (windowed)
    W2D = np.kron(Wd, Wr)                                  # (C*S, D*R) fused 2D DFT
    Wa = aw[:, None] * dft_matrix(G, A)                    # (G, A)  angle (windowed)
    WaT = Wa.T                                             # (A, G)  applied from the left
    # TODO(synk): PhaseCompensation source unavailable; using the standard
    # TDM-MIMO doppler phase term exp(-2j*pi*t*d/(TX*D)); no fftshift applied.
    P = np.exp(-2j * np.pi * np.outer(np.arange(TX), np.arange(D)) / (TX * D))
    # Pre-broadcast to the post-DFT (Bt*G, D*R) layout: row g -> tx = g // RX,
    # col d*R+r -> doppler bin d.  Pure elementwise multiply inside the kernel.
    Pf = np.tile(np.repeat(np.repeat(P, RX, axis=0), R, axis=1), (Bt, 1))

    f32 = jnp.float32
    cdt = compute_dtype
    # Lane dim = CS (256): fully packed vregs, no in-kernel relayout.
    x_re = jnp.real(x).astype(cdt).reshape(B * G, CS)
    x_im = jnp.imag(x).astype(cdt).reshape(B * G, CS)

    args = [
        x_re, x_im,
        jnp.asarray(W2D.real, cdt), jnp.asarray(W2D.imag, cdt),
        jnp.asarray(W2D.real + W2D.imag, cdt),
        jnp.asarray(Pf.real, f32), jnp.asarray(Pf.imag, f32),
        jnp.asarray(WaT.real, cdt), jnp.asarray(WaT.imag, cdt),
        jnp.asarray(WaT.real + WaT.imag, cdt),
    ]

    def full(shape):
        # Grid-invariant operand: constant index_map -> no re-DMA across steps.
        return pl.BlockSpec(shape, lambda b: (0,) * len(shape))

    in_specs = [
        pl.BlockSpec((Bt * G, CS), lambda b: (b, 0)),
        pl.BlockSpec((Bt * G, CS), lambda b: (b, 0)),
        full((CS, DR)), full((CS, DR)), full((CS, DR)),
        full((Bt * G, DR)), full((Bt * G, DR)),
        full((A, G)), full((A, G)), full((A, G)),
    ]
    out_specs = (
        pl.BlockSpec((Bt * A, DR), lambda b: (b, 0)),
        pl.BlockSpec((Bt * A, DR), lambda b: (b, 0)),
    )
    out_shape = (
        jax.ShapeDtypeStruct((B * A, DR), f32),
        jax.ShapeDtypeStruct((B * A, DR), f32),
    )

    # Advisory cost estimate for XLA's scheduler (small free win at tiny B).
    csize = np.dtype(cdt).itemsize
    flops = 6 * B * G * CS * DR + 6 * B * A * G * DR + 12 * B * G * DR
    bytes_accessed = (2 * B * G * CS * csize            # x planes
                      + (3 * CS * DR + 3 * A * G) * csize  # DFT weight planes
                      + 2 * Bt * G * DR * 4             # phase plane
                      + 2 * B * A * DR * 4)             # output planes
    cost = pl.CostEstimate(flops=flops, transcendentals=0,
                           bytes_accessed=bytes_accessed)

    o_re, o_im = pl.pallas_call(
        _make_kernel(Bt, G, A, cdt),
        grid=(steps,),
        in_specs=in_specs,
        out_specs=out_specs,
        out_shape=out_shape,
        compiler_params=pltpu.CompilerParams(dimension_semantics=("parallel",)),
        cost_estimate=cost,
    )(*args)

    # Free-view reshape (B*A, D*R) -> (B, A, D, R); planes stay separate.
    return o_re.reshape(B, A, D, R), o_im.reshape(B, A, D, R)


# ----------------------------------------------------------------------------
# Pure NumPy reference (same semantics) for a correctness check.
# ----------------------------------------------------------------------------
def reference_forward(x, raw_shape, fft_shape):
    TX, RX, C, S = raw_shape
    A, D, R = fft_shape
    G = TX * RX
    x = np.asarray(x).astype(np.complex128)
    rw = chebwin(S, 80)
    dw = chebwin(C, 60)
    aw = chebwin(G, 50)
    y = np.conj(x)
    y = np.fft.fft(y * rw, n=R, axis=4)
    y = np.fft.fft(y * dw[:, None], n=D, axis=3)
    P = np.exp(-2j * np.pi * np.outer(np.arange(TX), np.arange(D)) / (TX * D))
    y = y * P[None, :, None, :, None]
    y = y.reshape(x.shape[0], G, D, R)
    y = np.fft.fft(y * aw[None, :, None, None], n=A, axis=1)
    return y


if __name__ == "__main__":
    # raw_shape = (tx, rx, chirps, samples), fft_shape = (angle, doppler, range)
    B = 2
    raw_shape = (2, 4, 16, 16)
    fft_shape = (16, 16, 16)
    TX, RX, C, S = raw_shape

    key = jax.random.PRNGKey(0)
    kr, ki = jax.random.split(key)
    x = (jax.random.normal(kr, (B, TX, RX, C, S), jnp.float32)
         + 1j * jax.random.normal(ki, (B, TX, RX, C, S), jnp.float32))

    out_re, out_im = radar_3dfft(x, raw_shape, fft_shape)
    out_re, out_im = jax.block_until_ready((out_re, out_im))

    # Test-only host-side complex recombine (kept off the device path: the
    # public kernel output is the two float planes).
    out = np.asarray(out_re).astype(np.float64) + 1j * np.asarray(out_im).astype(np.float64)
    ref = reference_forward(x, raw_shape, fft_shape)
    np.testing.assert_allclose(out, ref, rtol=1e-3, atol=1e-3)
    assert out.shape == (B, fft_shape[0], fft_shape[1], fft_shape[2])
    print("KERNEL_OK")
</pallas_src>

<mosaic_0001>
module attributes {stable_mosaic.version = 11 : i64} {
  func.func @kernel(%arg0: i32, %arg1: memref<16x256xf32, #tpu.memory_space<vmem>>, %arg2: memref<16x256xf32, #tpu.memory_space<vmem>>, %arg3: memref<256x256xf32, #tpu.memory_space<vmem>>, %arg4: memref<256x256xf32, #tpu.memory_space<vmem>>, %arg5: memref<256x256xf32, #tpu.memory_space<vmem>>, %arg6: memref<16x256xf32, #tpu.memory_space<vmem>>, %arg7: memref<16x256xf32, #tpu.memory_space<vmem>>, %arg8: memref<16x8xf32, #tpu.memory_space<vmem>>, %arg9: memref<16x8xf32, #tpu.memory_space<vmem>>, %arg10: memref<16x8xf32, #tpu.memory_space<vmem>>, %arg11: memref<32x256xf32, #tpu.memory_space<vmem>>, %arg12: memref<32x256xf32, #tpu.memory_space<vmem>>) attributes {dimension_semantics = [#tpu.dimension_semantics<parallel>], iteration_bounds = array<i64: 1>, scalar_prefetch = 0 : i64, scratch_operands = 0 : i64, tpu.core_type = #tpu.core_type<tc>, window_params = [{transform_indices = @transform_0, window_bounds = array<i64: 16, 256>}, {transform_indices = @transform_1, window_bounds = array<i64: 16, 256>}, {pipeline_mode = #tpu.pipeline_mode<synchronous>, transform_indices = @transform_2, window_bounds = array<i64: 256, 256>}, {pipeline_mode = #tpu.pipeline_mode<synchronous>, transform_indices = @transform_3, window_bounds = array<i64: 256, 256>}, {pipeline_mode = #tpu.pipeline_mode<synchronous>, transform_indices = @transform_4, window_bounds = array<i64: 256, 256>}, {pipeline_mode = #tpu.pipeline_mode<synchronous>, transform_indices = @transform_5, window_bounds = array<i64: 16, 256>}, {pipeline_mode = #tpu.pipeline_mode<synchronous>, transform_indices = @transform_6, window_bounds = array<i64: 16, 256>}, {pipeline_mode = #tpu.pipeline_mode<synchronous>, transform_indices = @transform_7, window_bounds = array<i64: 16, 8>}, {pipeline_mode = #tpu.pipeline_mode<synchronous>, transform_indices = @transform_8, window_bounds = array<i64: 16, 8>}, {pipeline_mode = #tpu.pipeline_mode<synchronous>, transform_indices = @transform_9, window_bounds = array<i64: 16, 8>}, {transform_indices = @transform_10, window_bounds = array<i64: 32, 256>}, {transform_indices = @transform_11, window_bounds = array<i64: 32, 256>}]} {
    %c0 = arith.constant 0 : index
    %c0_0 = arith.constant 0 : index
    %0 = vector.load %arg1[%c0, %c0_0] : memref<16x256xf32, #tpu.memory_space<vmem>>, vector<16x256xf32>
    %c0_1 = arith.constant 0 : index
    %c0_2 = arith.constant 0 : index
    %1 = vector.load %arg2[%c0_1, %c0_2] : memref<16x256xf32, #tpu.memory_space<vmem>>, vector<16x256xf32>
    %c0_3 = arith.constant 0 : index
    %c0_4 = arith.constant 0 : index
    %2 = vector.load %arg3[%c0_3, %c0_4] : memref<256x256xf32, #tpu.memory_space<vmem>>, vector<256x256xf32>
    %cst = arith.constant dense<0.000000e+00> : vector<16x256xf32>
    %3 = tpu.matmul %0, %2, %cst {dimension_numbers = #tpu.dot_dimension_numbers<[1], [0], [0], [1], [0, 0, 1, 1], [], []>} : vector<16x256xf32>, vector<256x256xf32>, vector<16x256xf32> -> vector<16x256xf32>
    %c0_5 = arith.constant 0 : index
    %c0_6 = arith.constant 0 : index
    %4 = vector.load %arg4[%c0_5, %c0_6] : memref<256x256xf32, #tpu.memory_space<vmem>>, vector<256x256xf32>
    %cst_7 = arith.constant dense<0.000000e+00> : vector<16x256xf32>
    %5 = tpu.matmul %1, %4, %cst_7 {dimension_numbers = #tpu.dot_dimension_numbers<[1], [0], [0], [1], [0, 0, 1, 1], [], []>} : vector<16x256xf32>, vector<256x256xf32>, vector<16x256xf32> -> vector<16x256xf32>
    %6 = arith.subf %0, %1 : vector<16x256xf32>
    %c0_8 = arith.constant 0 : index
    %c0_9 = arith.constant 0 : index
    %7 = vector.load %arg5[%c0_8, %c0_9] : memref<256x256xf32, #tpu.memory_space<vmem>>, vector<256x256xf32>
    %cst_10 = arith.constant dense<0.000000e+00> : vector<16x256xf32>
    %8 = tpu.matmul %6, %7, %cst_10 {dimension_numbers = #tpu.dot_dimension_numbers<[1], [0], [0], [1], [0, 0, 1, 1], [], []>} : vector<16x256xf32>, vector<256x256xf32>, vector<16x256xf32> -> vector<16x256xf32>
    %9 = arith.addf %3, %5 : vector<16x256xf32>
    %10 = arith.subf %8, %3 : vector<16x256xf32>
    %11 = arith.addf %10, %5 : vector<16x256xf32>
    %c0_11 = arith.constant 0 : index
    %c0_12 = arith.constant 0 : index
    %12 = vector.load %arg6[%c0_11, %c0_12] : memref<16x256xf32, #tpu.memory_space<vmem>>, vector<16x256xf32>
    %c0_13 = arith.constant 0 : index
    %c0_14 = arith.constant 0 : index
    %13 = vector.load %arg7[%c0_13, %c0_14] : memref<16x256xf32, #tpu.memory_space<vmem>>, vector<16x256xf32>
    %14 = arith.mulf %9, %12 : vector<16x256xf32>
    %15 = arith.mulf %11, %13 : vector<16x256xf32>
    %16 = arith.subf %14, %15 : vector<16x256xf32>
    %17 = arith.mulf %9, %13 : vector<16x256xf32>
    %18 = arith.mulf %11, %12 : vector<16x256xf32>
    %19 = arith.addf %17, %18 : vector<16x256xf32>
    %c0_15 = arith.constant 0 : index
    %c0_16 = arith.constant 0 : index
    %20 = vector.load %arg8[%c0_15, %c0_16] : memref<16x8xf32, #tpu.memory_space<vmem>>, vector<16x8xf32>
    %c0_17 = arith.constant 0 : index
    %c0_18 = arith.constant 0 : index
    %21 = vector.load %arg9[%c0_17, %c0_18] : memref<16x8xf32, #tpu.memory_space<vmem>>, vector<16x8xf32>
    %c0_19 = arith.constant 0 : index
    %c0_20 = arith.constant 0 : index
    %22 = vector.load %arg10[%c0_19, %c0_20] : memref<16x8xf32, #tpu.memory_space<vmem>>, vector<16x8xf32>
    %23 = vector.extract_strided_slice %16 {offsets = [0, 0], sizes = [8, 256], strides = [1, 1]} : vector<16x256xf32> to vector<8x256xf32>
    %24 = vector.extract_strided_slice %19 {offsets = [0, 0], sizes = [8, 256], strides = [1, 1]} : vector<16x256xf32> to vector<8x256xf32>
    %25 = arith.addf %23, %24 : vector<8x256xf32>
    %cst_21 = arith.constant dense<0.000000e+00> : vector<16x256xf32>
    %26 = tpu.matmul %20, %23, %cst_21 {dimension_numbers = #tpu.dot_dimension_numbers<[1], [0], [0], [1], [0, 0, 1, 1], [], []>} : vector<16x8xf32>, vector<8x256xf32>, vector<16x256xf32> -> vector<16x256xf32>
    %cst_22 = arith.constant dense<0.000000e+00> : vector<16x256xf32>
    %27 = tpu.matmul %21, %24, %cst_22 {dimension_numbers = #tpu.dot_dimension_numbers<[1], [0], [0], [1], [0, 0, 1, 1], [], []>} : vector<16x8xf32>, vector<8x256xf32>, vector<16x256xf32> -> vector<16x256xf32>
    %cst_23 = arith.constant dense<0.000000e+00> : vector<16x256xf32>
    %28 = tpu.matmul %22, %25, %cst_23 {dimension_numbers = #tpu.dot_dimension_numbers<[1], [0], [0], [1], [0, 0, 1, 1], [], []>} : vector<16x8xf32>, vector<8x256xf32>, vector<16x256xf32> -> vector<16x256xf32>
    %29 = arith.subf %26, %27 : vector<16x256xf32>
    %c0_24 = arith.constant 0 : index
    %c0_25 = arith.constant 0 : index
    %30 = vector.load %arg11[%c0_24, %c0_25] : memref<32x256xf32, #tpu.memory_space<vmem>>, vector<16x256xf32>
    tpu.vector_store %arg11[%c0_24, %c0_25], %29 {strides = array<i32>} : memref<32x256xf32, #tpu.memory_space<vmem>>, vector<16x256xf32>,
    %31 = arith.subf %28, %26 : vector<16x256xf32>
    %32 = arith.subf %31, %27 : vector<16x256xf32>
    %c0_26 = arith.constant 0 : index
    %c0_27 = arith.constant 0 : index
    %33 = vector.load %arg12[%c0_26, %c0_27] : memref<32x256xf32, #tpu.memory_space<vmem>>, vector<16x256xf32>
    tpu.vector_store %arg12[%c0_26, %c0_27], %32 {strides = array<i32>} : memref<32x256xf32, #tpu.memory_space<vmem>>, vector<16x256xf32>,
    %34 = vector.extract_strided_slice %16 {offsets = [8, 0], sizes = [8, 256], strides = [1, 1]} : vector<16x256xf32> to vector<8x256xf32>
    %35 = vector.extract_strided_slice %19 {offsets = [8, 0], sizes = [8, 256], strides = [1, 1]} : vector<16x256xf32> to vector<8x256xf32>
    %36 = arith.addf %34, %35 : vector<8x256xf32>
    %cst_28 = arith.constant dense<0.000000e+00> : vector<16x256xf32>
    %37 = tpu.matmul %20, %34, %cst_28 {dimension_numbers = #tpu.dot_dimension_numbers<[1], [0], [0], [1], [0, 0, 1, 1], [], []>} : vector<16x8xf32>, vector<8x256xf32>, vector<16x256xf32> -> vector<16x256xf32>
    %cst_29 = arith.constant dense<0.000000e+00> : vector<16x256xf32>
    %38 = tpu.matmul %21, %35, %cst_29 {dimension_numbers = #tpu.dot_dimension_numbers<[1], [0], [0], [1], [0, 0, 1, 1], [], []>} : vector<16x8xf32>, vector<8x256xf32>, vector<16x256xf32> -> vector<16x256xf32>
    %cst_30 = arith.constant dense<0.000000e+00> : vector<16x256xf32>
    %39 = tpu.matmul %22, %36, %cst_30 {dimension_numbers = #tpu.dot_dimension_numbers<[1], [0], [0], [1], [0, 0, 1, 1], [], []>} : vector<16x8xf32>, vector<8x256xf32>, vector<16x256xf32> -> vector<16x256xf32>
    %40 = arith.subf %37, %38 : vector<16x256xf32>
    %c16 = arith.constant 16 : index
    %c0_31 = arith.constant 0 : index
    %41 = vector.load %arg11[%c16, %c0_31] : memref<32x256xf32, #tpu.memory_space<vmem>>, vector<16x256xf32>
    tpu.vector_store %arg11[%c16, %c0_31], %40 {strides = array<i32>} : memref<32x256xf32, #tpu.memory_space<vmem>>, vector<16x256xf32>,
    %42 = arith.subf %39, %37 : vector<16x256xf32>
    %43 = arith.subf %42, %38 : vector<16x256xf32>
    %c16_32 = arith.constant 16 : index
    %c0_33 = arith.constant 0 : index
    %44 = vector.load %arg12[%c16_32, %c0_33] : memref<32x256xf32, #tpu.memory_space<vmem>>, vector<16x256xf32>
    tpu.vector_store %arg12[%c16_32, %c0_33], %43 {strides = array<i32>} : memref<32x256xf32, #tpu.memory_space<vmem>>, vector<16x256xf32>,
    return
  }
  func.func @transform_0(%arg0: i32) -> (i32, i32) {
    %c0_i32 = arith.constant 0 : i32
    %c0_i32_0 = arith.constant 0 : i32
    return %arg0, %c0_i32 : i32, i32
  }
  func.func @transform_1(%arg0: i32) -> (i32, i32) {
    %c0_i32 = arith.constant 0 : i32
    %c0_i32_0 = arith.constant 0 : i32
    return %arg0, %c0_i32 : i32, i32
  }
  func.func @transform_2(%arg0: i32) -> (i32, i32) {
    %c0_i32 = arith.constant 0 : i32
    %c0_i32_0 = arith.constant 0 : i32
    %c0_i32_1 = arith.constant 0 : i32
    return %c0_i32, %c0_i32_0 : i32, i32
  }
  func.func @transform_3(%arg0: i32) -> (i32, i32) {
    %c0_i32 = arith.constant 0 : i32
    %c0_i32_0 = arith.constant 0 : i32
    %c0_i32_1 = arith.constant 0 : i32
    return %c0_i32, %c0_i32_0 : i32, i32
  }
  func.func @transform_4(%arg0: i32) -> (i32, i32) {
    %c0_i32 = arith.constant 0 : i32
    %c0_i32_0 = arith.constant 0 : i32
    %c0_i32_1 = arith.constant 0 : i32
    return %c0_i32, %c0_i32_0 : i32, i32
  }
  func.func @transform_5(%arg0: i32) -> (i32, i32) {
    %c0_i32 = arith.constant 0 : i32
    %c0_i32_0 = arith.constant 0 : i32
    %c0_i32_1 = arith.constant 0 : i32
    return %c0_i32, %c0_i32_0 : i32, i32
  }
  func.func @transform_6(%arg0: i32) -> (i32, i32) {
    %c0_i32 = arith.constant 0 : i32
    %c0_i32_0 = arith.constant 0 : i32
    %c0_i32_1 = arith.constant 0 : i32
    return %c0_i32, %c0_i32_0 : i32, i32
  }
  func.func @transform_7(%arg0: i32) -> (i32, i32) {
    %c0_i32 = arith.constant 0 : i32
    %c0_i32_0 = arith.constant 0 : i32
    %c0_i32_1 = arith.constant 0 : i32
    return %c0_i32, %c0_i32_0 : i32, i32
  }
  func.func @transform_8(%arg0: i32) -> (i32, i32) {
    %c0_i32 = arith.constant 0 : i32
    %c0_i32_0 = arith.constant 0 : i32
    %c0_i32_1 = arith.constant 0 : i32
    return %c0_i32, %c0_i32_0 : i32, i32
  }
  func.func @transform_9(%arg0: i32) -> (i32, i32) {
    %c0_i32 = arith.constant 0 : i32
    %c0_i32_0 = arith.constant 0 : i32
    %c0_i32_1 = arith.constant 0 : i32
    return %c0_i32, %c0_i32_0 : i32, i32
  }
  func.func @transform_10(%arg0: i32) -> (i32, i32) {
    %c0_i32 = arith.constant 0 : i32
    %c0_i32_0 = arith.constant 0 : i32
    return %arg0, %c0_i32 : i32, i32
  }
  func.func @transform_11(%arg0: i32) -> (i32, i32) {
    %c0_i32 = arith.constant 0 : i32
    %c0_i32_0 = arith.constant 0 : i32
    return %arg0, %c0_i32 : i32, i32
  }
}

</mosaic_0001>

<llo_original>
// kernel: tpu_custom_call.1
$region0: #{tpu_custom_call.1}
  #allocation0 [shape = 'u32[]', space=smem, size = 0x4, offset = 0x4, fixed_abs, tag = 'smem constant byte address 0x4 - core index']
  #allocation1 [shape = 'u32[144,128]{1,0:T(1,128)}', space=vmem, size = 0x12000, scoped, tag = 'internal scratch']
  %s0 = inlined_call_operand.vmem [shape: f32[16,256], index: 0, kind: input, shape index: {}]
  %s1 = inlined_call_operand.vmem [shape: f32[16,256], index: 1, kind: input, shape index: {}]
  %s2 = inlined_call_operand.hbm [shape: f32[256,256], index: 2, kind: input, shape index: {}]
  %s3 = inlined_call_operand.hbm [shape: f32[256,256], index: 3, kind: input, shape index: {}]
  %s4 = inlined_call_operand.hbm [shape: f32[256,256], index: 4, kind: input, shape index: {}]
  %s5 = inlined_call_operand.hbm [shape: f32[16,256], index: 5, kind: input, shape index: {}]
  %s6 = inlined_call_operand.hbm [shape: f32[16,256], index: 6, kind: input, shape index: {}]
  %s7 = inlined_call_operand.vmem [shape: f32[16,8], index: 7, kind: input, shape index: {}]
  %s8 = inlined_call_operand.vmem [shape: f32[16,8], index: 8, kind: input, shape index: {}]
  %s9 = inlined_call_operand.vmem [shape: f32[16,8], index: 9, kind: input, shape index: {}]
  %s10 = inlined_call_operand.hbm [shape: f32[32,256], index: 10, kind: output, shape index: {0}]
  %s11 = inlined_call_operand.hbm [shape: f32[32,256], index: 11, kind: output, shape index: {1}]
  %12 = xla_tuple %s10, %s11
  %s13 = sld [smem:[#allocation0]]
  $region78: #{tpu_custom_call.1} parent=0
    _
  %s15 = ssub.s32 1, %s13
  %s16 = scalar_select 0, %s15, %s13
  $region1: #{tpu_custom_call.1} parent=0
    #allocation2 [shape = 'u8[262144]{0}', space=vmem, size = 0x40000, scoped, tag = 'input window, operand 2, single buffered']
    #allocation3 [shape = 's32[1]{0}', space=sflag, size = 0x4, scoped, tag = 'scoped memory for tpu_custom_call.1']
    #allocation4 [shape = 's32[1]{0}', space=sflag, size = 0x4, scoped, tag = 'scoped memory for tpu_custom_call.1']
    #allocation5 [shape = 'u8[262144]{0}', space=vmem, size = 0x40000, scoped, tag = 'input window, operand 3, single buffered']
    #allocation6 [shape = 's32[1]{0}', space=sflag, size = 0x4, scoped, tag = 'scoped memory for tpu_custom_call.1']
    #allocation7 [shape = 'u8[262144]{0}', space=vmem, size = 0x40000, scoped, tag = 'input window, operand 4, single buffered']
    #allocation8 [shape = 'u8[16384]{0}', space=vmem, size = 0x4000, scoped, tag = 'input window, operand 5, single buffered']
    #allocation9 [shape = 's32[1]{0}', space=sflag, size = 0x4, scoped, tag = 'scoped memory for tpu_custom_call.1']
    #allocation10 [shape = 'u8[16384]{0}', space=vmem, size = 0x4000, scoped, tag = 'input window, operand 6, single buffered']
    #allocation11 [shape = 'u8[32768]{0}', space=vmem, size = 0x8000, scoped, tag = 'output window, operand 0, single buffered']
    #allocation12 [shape = 'u8[32768]{0}', space=vmem, size = 0x8000, scoped, tag = 'output window, operand 1, single buffered']
    #allocation13 [shape = 's32[1]{0}', space=sflag, size = 0x4, scoped, tag = 'scoped memory for tpu_custom_call.1']
    %17 = vsyncpa [#allocation3], 0
    %18 = vsyncpa [#allocation6], 0
    %19 = vsyncpa [#allocation9], 0
    %20 = vsyncpa [#allocation4], 0
    %21 = vsyncpa [#allocation13], 0
    // Predicated region
    $region2: #{tpu_custom_call.1} parent=1 // pred_check
      _
    $region3: #{tpu_custom_call.1} parent=1 // pred_check_branch
      %23 = sbr.rel (0) target = $region5
    $region4: #{tpu_custom_call.1} parent=1 // pred_region
      _
    $region5: #{tpu_custom_call.1} parent=1 // pred_fallthru
      _
    // Predicated region
    $region6: #{tpu_custom_call.1} parent=1 // pred_check
      _
    $region7: #{tpu_custom_call.1} parent=1 // pred_check_branch
      %25 = sbr.rel (0) target = $region9
    $region8: #{tpu_custom_call.1} parent=1 // pred_region
      _
    $region9: #{tpu_custom_call.1} parent=1 // pred_fallthru
      _
    // Predicated region
    $region10: #{tpu_custom_call.1} parent=1 // pred_check
      _
    $region11: #{tpu_custom_call.1} parent=1 // pred_check_branch
      %27 = sbr.rel (0) target = $region13
    $region12: #{tpu_custom_call.1} parent=1 // pred_region
      %s29 = ssub.s32 8192, 8192
      %30 = vsyncadd [#allocation3], %s29
      %s31 = sshll.u32 [#allocation2], 4
      %s32 = int_to_ptr.vmem [resolvable:$true] %s31
      %37 = dma.hbm_to_vmem [thread:$0]  %s2, 8192, %s32, [#allocation3], 256, 256, 16
    $region13: #{tpu_custom_call.1} parent=1 // pred_fallthru
      _
    // Predicated region
    $region14: #{tpu_custom_call.1} parent=1 // pred_check
      _
    $region15: #{tpu_custom_call.1} parent=1 // pred_check_branch
      %39 = sbr.rel (0) target = $region17
    $region16: #{tpu_custom_call.1} parent=1 // pred_region
      %s41 = ssub.s32 8192, 8192
      %42 = vsyncadd [#allocation6], %s41
      %s43 = sshll.u32 [#allocation5], 4
      %s44 = int_to_ptr.vmem [resolvable:$true] %s43
      %49 = dma.hbm_to_vmem [thread:$0]  %s3, 8192, %s44, [#allocation6], 256, 256, 16
    $region17: #{tpu_custom_call.1} parent=1 // pred_fallthru
      _
    // Predicated region
    $region18: #{tpu_custom_call.1} parent=1 // pred_check
      _
    $region19: #{tpu_custom_call.1} parent=1 // pred_check_branch
      %51 = sbr.rel (0) target = $region21
    $region20: #{tpu_custom_call.1} parent=1 // pred_region
      %s53 = ssub.s32 8192, 8192
      %54 = vsyncadd [#allocation6], %s53
      %s55 = sshll.u32 [#allocation7], 4
      %s56 = int_to_ptr.vmem [resolvable:$true] %s55
      %61 = dma.hbm_to_vmem [thread:$0]  %s4, 8192, %s56, [#allocation6], 256, 256, 16
    $region21: #{tpu_custom_call.1} parent=1 // pred_fallthru
      _
    // Predicated region
    $region22: #{tpu_custom_call.1} parent=1 // pred_check
      _
    $region23: #{tpu_custom_call.1} parent=1 // pred_check_branch
      %63 = sbr.rel (0) target = $region25
    $region24: #{tpu_custom_call.1} parent=1 // pred_region
      %s65 = ssub.s32 512, 512
      %66 = vsyncadd [#allocation9], %s65
      %s67 = sshll.u32 [#allocation8], 4
      %s68 = int_to_ptr.vmem [resolvable:$true] %s67
      %73 = dma.hbm_to_vmem [thread:$0]  %s5, 512, %s68, [#allocation9], 256, 256, 16
    $region25: #{tpu_custom_call.1} parent=1 // pred_fallthru
      _
    // Predicated region
    $region26: #{tpu_custom_call.1} parent=1 // pred_check
      _
    $region27: #{tpu_custom_call.1} parent=1 // pred_check_branch
      %75 = sbr.rel (0) target = $region29
    $region28: #{tpu_custom_call.1} parent=1 // pred_region
      %s77 = ssub.s32 512, 512
      %78 = vsyncadd [#allocation9], %s77
      %s79 = sshll.u32 [#allocation10], 4
      %s80 = int_to_ptr.vmem [resolvable:$true] %s79
      %85 = dma.hbm_to_vmem [thread:$0]  %s6, 512, %s80, [#allocation9], 256, 256, 16
    $region29: #{tpu_custom_call.1} parent=1 // pred_fallthru
      _
    // Predicated region
    $region30: #{tpu_custom_call.1} parent=1 // pred_check
      _
    $region31: #{tpu_custom_call.1} parent=1 // pred_check_branch
      %87 = sbr.rel (0) target = $region33
    $region32: #{tpu_custom_call.1} parent=1 // pred_region
      _
    $region33: #{tpu_custom_call.1} parent=1 // pred_fallthru
      _
    // Predicated region
    $region34: #{tpu_custom_call.1} parent=1 // pred_check
      _
    $region35: #{tpu_custom_call.1} parent=1 // pred_check_branch
      %89 = sbr.rel (0) target = $region37
    $region36: #{tpu_custom_call.1} parent=1 // pred_region
      _
    $region37: #{tpu_custom_call.1} parent=1 // pred_fallthru
      _
    // Predicated region
    $region38: #{tpu_custom_call.1} parent=1 // pred_check
      _
    $region39: #{tpu_custom_call.1} parent=1 // pred_check_branch
      %91 = sbr.rel (0) target = $region41
    $region40: #{tpu_custom_call.1} parent=1 // pred_region
      _
    $region41: #{tpu_custom_call.1} parent=1 // pred_fallthru
      _
    // Predicated region
    $region42: #{tpu_custom_call.1} parent=1 // pred_check
      _
    $region43: #{tpu_custom_call.1} parent=1 // pred_check_branch
      %93 = sbr.rel (0) target = $region45
    $region44: #{tpu_custom_call.1} parent=1 // pred_region
      %94 = dma.done [#allocation3], 8192
    $region45: #{tpu_custom_call.1} parent=1 // pred_fallthru
      _
    // Predicated region
    $region46: #{tpu_custom_call.1} parent=1 // pred_check
      _
    $region47: #{tpu_custom_call.1} parent=1 // pred_check_branch
      %96 = sbr.rel (0) target = $region49
    $region48: #{tpu_custom_call.1} parent=1 // pred_region
      %97 = dma.done [#allocation6], 8192
    $region49: #{tpu_custom_call.1} parent=1 // pred_fallthru
      _
    // Predicated region
    $region50: #{tpu_custom_call.1} parent=1 // pred_check
      _
    $region51: #{tpu_custom_call.1} parent=1 // pred_check_branch
      %99 = sbr.rel (0) target = $region53
    $region52: #{tpu_custom_call.1} parent=1 // pred_region
      %100 = dma.done [#allocation6], 8192
    $region53: #{tpu_custom_call.1} parent=1 // pred_fallthru
      _
    // Predicated region
    $region54: #{tpu_custom_call.1} parent=1 // pred_check
      _
    $region55: #{tpu_custom_call.1} parent=1 // pred_check_branch
      %102 = sbr.rel (0) target = $region57
    $region56: #{tpu_custom_call.1} parent=1 // pred_region
      %103 = dma.done [#allocation9], 512
    $region57: #{tpu_custom_call.1} parent=1 // pred_fallthru
      _
    // Predicated region
    $region58: #{tpu_custom_call.1} parent=1 // pred_check
      _
    $region59: #{tpu_custom_call.1} parent=1 // pred_check_branch
      %105 = sbr.rel (0) target = $region61
    $region60: #{tpu_custom_call.1} parent=1 // pred_region
      %106 = dma.done [#allocation9], 512
    $region61: #{tpu_custom_call.1} parent=1 // pred_fallthru
      _
    %v107 = vld [vmem:[%s0] sm:$0xff]
    %v108 = vld [vmem:[%s0 + $0x8] sm:$0xff]
    %v109 = vld [vmem:[%s0 + $0x10] sm:$0xff]
    %v110 = vld [vmem:[%s0 + $0x18] sm:$0xff]
    %v111 = vld [vmem:[%s1] sm:$0xff]
    %v112 = vld [vmem:[%s1 + $0x8] sm:$0xff]
    %v113 = vld [vmem:[%s1 + $0x10] sm:$0xff]
    %v114 = vld [vmem:[%s1 + $0x18] sm:$0xff]
    %v115 = vld [vmem:[#allocation2] sm:$0xff]
    %v116 = vld [vmem:[#allocation2 + $0x8] sm:$0xff]
    %v117 = vld [vmem:[#allocation2 + $0x10] sm:$0xff]
    %v118 = vld [vmem:[#allocation2 + $0x18] sm:$0xff]
    %v119 = vld [vmem:[#allocation2 + $0x20] sm:$0xff]
    %v120 = vld [vmem:[#allocation2 + $0x28] sm:$0xff]
    %v121 = vld [vmem:[#allocation2 + $0x30] sm:$0xff]
    %v122 = vld [vmem:[#allocation2 + $0x38] sm:$0xff]
    %v123 = vld [vmem:[#allocation2 + $0x40] sm:$0xff]
    %v124 = vld [vmem:[#allocation2 + $0x48] sm:$0xff]
    %v125 = vld [vmem:[#allocation2 + $0x50] sm:$0xff]
    %v126 = vld [vmem:[#allocation2 + $0x58] sm:$0xff]
    %v127 = vld [vmem:[#allocation2 + $0x60] sm:$0xff]
    %v128 = vld [vmem:[#allocation2 + $0x68] sm:$0xff]
    %v129 = vld [vmem:[#allocation2 + $0x70] sm:$0xff]
    %v130 = vld [vmem:[#allocation2 + $0x78] sm:$0xff]
    %v131 = vld [vmem:[#allocation2 + $0x80] sm:$0xff]
    %v132 = vld [vmem:[#allocation2 + $0x88] sm:$0xff]
    %v133 = vld [vmem:[#allocation2 + $0x90] sm:$0xff]
    %v134 = vld [vmem:[#allocation2 + $0x98] sm:$0xff]
    %v135 = vld [vmem:[#allocation2 + $0xa0] sm:$0xff]
    %v136 = vld [vmem:[#allocation2 + $0xa8] sm:$0xff]
    %v137 = vld [vmem:[#allocation2 + $0xb0] sm:$0xff]
    %v138 = vld [vmem:[#allocation2 + $0xb8] sm:$0xff]
    %v139 = vld [vmem:[#allocation2 + $0xc0] sm:$0xff]
    %v140 = vld [vmem:[#allocation2 + $0xc8] sm:$0xff]
    %v141 = vld [vmem:[#allocation2 + $0xd0] sm:$0xff]
    %v142 = vld [vmem:[#allocation2 + $0xd8] sm:$0xff]
    %v143 = vld [vmem:[#allocation2 + $0xe0] sm:$0xff]
    %v144 = vld [vmem:[#allocation2 + $0xe8] sm:$0xff]
    %v145 = vld [vmem:[#allocation2 + $0xf0] sm:$0xff]
    %v146 = vld [vmem:[#allocation2 + $0xf8] sm:$0xff]
    %v147 = vld [vmem:[#allocation2 + $0x100] sm:$0xff]
    %v148 = vld [vmem:[#allocation2 + $0x108] sm:$0xff]
    %v149 = vld [vmem:[#allocation2 + $0x110] sm:$0xff]
    %v150 = vld [vmem:[#allocation2 + $0x118] sm:$0xff]
    %v151 = vld [vmem:[#allocation2 + $0x120] sm:$0xff]
    %v152 = vld [vmem:[#allocation2 + $0x128] sm:$0xff]
    %v153 = vld [vmem:[#allocation2 + $0x130] sm:$0xff]
    %v154 = vld [vmem:[#allocation2 + $0x138] sm:$0xff]
    %v155 = vld [vmem:[#allocation2 + $0x140] sm:$0xff]
    %v156 = vld [vmem:[#allocation2 + $0x148] sm:$0xff]
    %v157 = vld [vmem:[#allocation2 + $0x150] sm:$0xff]
    %v158 = vld [vmem:[#allocation2 + $0x158] sm:$0xff]
    %v159 = vld [vmem:[#allocation2 + $0x160] sm:$0xff]
    %v160 = vld [vmem:[#allocation2 + $0x168] sm:$0xff]
    %v161 = vld [vmem:[#allocation2 + $0x170] sm:$0xff]
    %v162 = vld [vmem:[#allocation2 + $0x178] sm:$0xff]
    %v163 = vld [vmem:[#allocation2 + $0x180] sm:$0xff]
    %v164 = vld [vmem:[#allocation2 + $0x188] sm:$0xff]
    %v165 = vld [vmem:[#allocation2 + $0x190] sm:$0xff]
    %v166 = vld [vmem:[#allocation2 + $0x198] sm:$0xff]
    %v167 = vld [vmem:[#allocation2 + $0x1a0] sm:$0xff]
    %v168 = vld [vmem:[#allocation2 + $0x1a8] sm:$0xff]
    %v169 = vld [vmem:[#allocation2 + $0x1b0] sm:$0xff]
    %v170 = vld [vmem:[#allocation2 + $0x1b8] sm:$0xff]
    %v171 = vld [vmem:[#allocation2 + $0x1c0] sm:$0xff]
    %v172 = vld [vmem:[#allocation2 + $0x1c8] sm:$0xff]
    %v173 = vld [vmem:[#allocation2 + $0x1d0] sm:$0xff]
    %v174 = vld [vmem:[#allocation2 + $0x1d8] sm:$0xff]
    %v175 = vld [vmem:[#allocation2 + $0x1e0] sm:$0xff]
    %v176 = vld [vmem:[#allocation2 + $0x1e8] sm:$0xff]
    %v177 = vld [vmem:[#allocation2 + $0x1f0] sm:$0xff]
    %v178 = vld [vmem:[#allocation2 + $0x1f8] sm:$0xff]
    %179 = vmatprep.subr.mxu0 %v146
    %180 = vmatpush1.msra.mxu0 %v145
    %181 = vmatprep.subr.mxu0 %v144
    %182 = vmatpush1.msra.mxu0 %v143
    %183 = vmatprep.subr.mxu0 %v142
    %184 = vmatpush1.msra.mxu0 %v141
    %185 = vmatprep.subr.mxu0 %v140
    %186 = vmatpush1.msra.mxu0 %v139
    %187 = vmatprep.subr.mxu0 %v138
    %188 = vmatpush1.msra.mxu0 %v137
    %189 = vmatprep.subr.mxu0 %v136
    %190 = vmatpush1.msra.mxu0 %v135
    %191 = vmatprep.subr.mxu0 %v134
    %192 = vmatpush1.msra.mxu0 %v133
    %193 = vmatprep.subr.mxu0 %v132
    %194 = vmatpush1.msra.mxu0 %v131
    %195 = vmatprep.subr.mxu0 %v130
    %196 = vmatpush1.msra.mxu0 %v129
    %197 = vmatprep.subr.mxu0 %v128
    %198 = vmatpush1.msra.mxu0 %v127
    %199 = vmatprep.subr.mxu0 %v126
    %200 = vmatpush1.msra.mxu0 %v125
    %201 = vmatprep.subr.mxu0 %v124
    %202 = vmatpush1.msra.mxu0 %v123
    %203 = vmatprep.subr.mxu0 %v122
    %204 = vmatpush1.msra.mxu0 %v121
    %205 = vmatprep.subr.mxu0 %v120
    %206 = vmatpush1.msra.mxu0 %v119
    %207 = vmatprep.subr.mxu0 %v118
    %208 = vmatpush1.msra.mxu0 %v117
    %209 = vmatprep.subr.mxu0 %v116
    %210 = vmatpush1.msra.mxu0 %v115
    %211 = vmatprep.subr.mxu0 %v178
    %212 = vmatpush2.msra.mxu0 %v177
    %213 = vmatprep.subr.mxu0 %v176
    %214 = vmatpush2.msra.mxu0 %v175
    %215 = vmatprep.subr.mxu0 %v174
    %216 = vmatpush2.msra.mxu0 %v173
    %217 = vmatprep.subr.mxu0 %v172
    %218 = vmatpush2.msra.mxu0 %v171
    %219 = vmatprep.subr.mxu0 %v170
    %220 = vmatpush2.msra.mxu0 %v169
    %221 = vmatprep.subr.mxu0 %v168
    %222 = vmatpush2.msra.mxu0 %v167
    %223 = vmatprep.subr.mxu0 %v166
    %224 = vmatpush2.msra.mxu0 %v165
    %225 = vmatprep.subr.mxu0 %v164
    %226 = vmatpush2.msra.mxu0 %v163
    %227 = vmatprep.subr.mxu0 %v162
    %228 = vmatpush2.msra.mxu0 %v161
    %229 = vmatprep.subr.mxu0 %v160
    %230 = vmatpush2.msra.mxu0 %v159
    %231 = vmatprep.subr.mxu0 %v158
    %232 = vmatpush2.msra.mxu0 %v157
    %233 = vmatprep.subr.mxu0 %v156
    %234 = vmatpush2.msra.mxu0 %v155
    %235 = vmatprep.subr.mxu0 %v154
    %236 = vmatpush2.msra.mxu0 %v153
    %237 = vmatprep.subr.mxu0 %v152
    %238 = vmatpush2.msra.mxu0 %v151
    %239 = vmatprep.subr.mxu0 %v150
    %240 = vmatpush2.msra.mxu0 %v149
    %241 = vmatprep.subr.mxu0 %v148
    %242 = vmatpush2.msra.mxu0 %v147
    %243 = vmatprep.mubr.f32.mxu0 %v108
    %244 = vmatmul.mubr.f32.gmra.mxu0 %v107
    %v245 = vpop.f32.mrf.mxu0
    %v246 = vadd.f32 0.0, %v245
    %v247 = vpop.f32.mrf.mxu0
    %v248 = vadd.f32 0.0, %v247
    %249 = vmatprep.mubr.f32.mxu0 %v110
    %250 = vmatmul.mubr.f32.gmra.mxu0 %v109
    %v251 = vpop.f32.mrf.mxu0
    %v252 = vadd.f32 0.0, %v251
    %v253 = vpop.f32.mrf.mxu0
    %v254 = vadd.f32 0.0, %v253
    %255 = vdwg.mxu0
    %v256 = vld [vmem:[#allocation5] sm:$0xff]
    %v257 = vld [vmem:[#allocation5 + $0x8] sm:$0xff]
    %v258 = vld [vmem:[#allocation5 + $0x10] sm:$0xff]
    %v259 = vld [vmem:[#allocation5 + $0x18] sm:$0xff]
    %v260 = vld [vmem:[#allocation5 + $0x20] sm:$0xff]
    %v261 = vld [vmem:[#allocation5 + $0x28] sm:$0xff]
    %v262 = vld [vmem:[#allocation5 + $0x30] sm:$0xff]
    %v263 = vld [vmem:[#allocation5 + $0x38] sm:$0xff]
    %v264 = vld [vmem:[#allocation5 + $0x40] sm:$0xff]
    %v265 = vld [vmem:[#allocation5 + $0x48] sm:$0xff]
    %v266 = vld [vmem:[#allocation5 + $0x50] sm:$0xff]
    %v267 = vld [vmem:[#allocation5 + $0x58] sm:$0xff]
    %v268 = vld [vmem:[#allocation5 + $0x60] sm:$0xff]
    %v269 = vld [vmem:[#allocation5 + $0x68] sm:$0xff]
    %v270 = vld [vmem:[#allocation5 + $0x70] sm:$0xff]
    %v271 = vld [vmem:[#allocation5 + $0x78] sm:$0xff]
    %v272 = vld [vmem:[#allocation5 + $0x80] sm:$0xff]
    %v273 = vld [vmem:[#allocation5 + $0x88] sm:$0xff]
    %v274 = vld [vmem:[#allocation5 + $0x90] sm:$0xff]
    %v275 = vld [vmem:[#allocation5 + $0x98] sm:$0xff]
    %v276 = vld [vmem:[#allocation5 + $0xa0] sm:$0xff]
    %v277 = vld [vmem:[#allocation5 + $0xa8] sm:$0xff]
    %v278 = vld [vmem:[#allocation5 + $0xb0] sm:$0xff]
    %v279 = vld [vmem:[#allocation5 + $0xb8] sm:$0xff]
    %v280 = vld [vmem:[#allocation5 + $0xc0] sm:$0xff]
    %v281 = vld [vmem:[#allocation5 + $0xc8] sm:$0xff]
    %v282 = vld [vmem:[#allocation5 + $0xd0] sm:$0xff]
    %v283 = vld [vmem:[#allocation5 + $0xd8] sm:$0xff]
    %v284 = vld [vmem:[#allocation5 + $0xe0] sm:$0xff]
    %v285 = vld [vmem:[#allocation5 + $0xe8] sm:$0xff]
    %v286 = vld [vmem:[#allocation5 + $0xf0] sm:$0xff]
    %v287 = vld [vmem:[#allocation5 + $0xf8] sm:$0xff]
    %v288 = vld [vmem:[#allocation5 + $0x100] sm:$0xff]
    %v289 = vld [vmem:[#allocation5 + $0x108] sm:$0xff]
    %v290 = vld [vmem:[#allocation5 + $0x110] sm:$0xff]
    %v291 = vld [vmem:[#allocation5 + $0x118] sm:$0xff]
    %v292 = vld [vmem:[#allocation5 + $0x120] sm:$0xff]
    %v293 = vld [vmem:[#allocation5 + $0x128] sm:$0xff]
    %v294 = vld [vmem:[#allocation5 + $0x130] sm:$0xff]
    %v295 = vld [vmem:[#allocation5 + $0x138] sm:$0xff]
    %v296 = vld [vmem:[#allocation5 + $0x140] sm:$0xff]
    %v297 = vld [vmem:[#allocation5 + $0x148] sm:$0xff]
    %v298 = vld [vmem:[#allocation5 + $0x150] sm:$0xff]
    %v299 = vld [vmem:[#allocation5 + $0x158] sm:$0xff]
    %v300 = vld [vmem:[#allocation5 + $0x160] sm:$0xff]
    %v301 = vld [vmem:[#allocation5 + $0x168] sm:$0xff]
    %v302 = vld [vmem:[#allocation5 + $0x170] sm:$0xff]
    %v303 = vld [vmem:[#allocation5 + $0x178] sm:$0xff]
    %v304 = vld [vmem:[#allocation5 + $0x180] sm:$0xff]
    %v305 = vld [vmem:[#allocation5 + $0x188] sm:$0xff]
    %v306 = vld [vmem:[#allocation5 + $0x190] sm:$0xff]
    %v307 = vld [vmem:[#allocation5 + $0x198] sm:$0xff]
    %v308 = vld [vmem:[#allocation5 + $0x1a0] sm:$0xff]
    %v309 = vld [vmem:[#allocation5 + $0x1a8] sm:$0xff]
    %v310 = vld [vmem:[#allocation5 + $0x1b0] sm:$0xff]
    %v311 = vld [vmem:[#allocation5 + $0x1b8] sm:$0xff]
    %v312 = vld [vmem:[#allocation5 + $0x1c0] sm:$0xff]
    %v313 = vld [vmem:[#allocation5 + $0x1c8] sm:$0xff]
    %v314 = vld [vmem:[#allocation5 + $0x1d0] sm:$0xff]
    %v315 = vld [vmem:[#allocation5 + $0x1d8] sm:$0xff]
    %v316 = vld [vmem:[#allocation5 + $0x1e0] sm:$0xff]
    %v317 = vld [vmem:[#allocation5 + $0x1e8] sm:$0xff]
    %v318 = vld [vmem:[#allocation5 + $0x1f0] sm:$0xff]
    %v319 = vld [vmem:[#allocation5 + $0x1f8] sm:$0xff]
    %320 = vmatprep.subr.mxu0 %v287
    %321 = vmatpush1.msra.mxu0 %v286
    %322 = vmatprep.subr.mxu0 %v285
    %323 = vmatpush1.msra.mxu0 %v284
    %324 = vmatprep.subr.mxu0 %v283
    %325 = vmatpush1.msra.mxu0 %v282
    %326 = vmatprep.subr.mxu0 %v281
    %327 = vmatpush1.msra.mxu0 %v280
    %328 = vmatprep.subr.mxu0 %v279
    %329 = vmatpush1.msra.mxu0 %v278
    %330 = vmatprep.subr.mxu0 %v277
    %331 = vmatpush1.msra.mxu0 %v276
    %332 = vmatprep.subr.mxu0 %v275
    %333 = vmatpush1.msra.mxu0 %v274
    %334 = vmatprep.subr.mxu0 %v273
    %335 = vmatpush1.msra.mxu0 %v272
    %336 = vmatprep.subr.mxu0 %v271
    %337 = vmatpush1.msra.mxu0 %v270
    %338 = vmatprep.subr.mxu0 %v269
    %339 = vmatpush1.msra.mxu0 %v268
    %340 = vmatprep.subr.mxu0 %v267
    %341 = vmatpush1.msra.mxu0 %v266
    %342 = vmatprep.subr.mxu0 %v265
    %343 = vmatpush1.msra.mxu0 %v264
    %344 = vmatprep.subr.mxu0 %v263
    %345 = vmatpush1.msra.mxu0 %v262
    %346 = vmatprep.subr.mxu0 %v261
    %347 = vmatpush1.msra.mxu0 %v260
    %348 = vmatprep.subr.mxu0 %v259
    %349 = vmatpush1.msra.mxu0 %v258
    %350 = vmatprep.subr.mxu0 %v257
    %351 = vmatpush1.msra.mxu0 %v256
    %352 = vmatprep.subr.mxu0 %v319
    %353 = vmatpush2.msra.mxu0 %v318
    %354 = vmatprep.subr.mxu0 %v317
    %355 = vmatpush2.msra.mxu0 %v316
    %356 = vmatprep.subr.mxu0 %v315
    %357 = vmatpush2.msra.mxu0 %v314
    %358 = vmatprep.subr.mxu0 %v313
    %359 = vmatpush2.msra.mxu0 %v312
    %360 = vmatprep.subr.mxu0 %v311
    %361 = vmatpush2.msra.mxu0 %v310
    %362 = vmatprep.subr.mxu0 %v309
    %363 = vmatpush2.msra.mxu0 %v308
    %364 = vmatprep.subr.mxu0 %v307
    %365 = vmatpush2.msra.mxu0 %v306
    %366 = vmatprep.subr.mxu0 %v305
    %367 = vmatpush2.msra.mxu0 %v304
    %368 = vmatprep.subr.mxu0 %v303
    %369 = vmatpush2.msra.mxu0 %v302
    %370 = vmatprep.subr.mxu0 %v301
    %371 = vmatpush2.msra.mxu0 %v300
    %372 = vmatprep.subr.mxu0 %v299
    %373 = vmatpush2.msra.mxu0 %v298
    %374 = vmatprep.subr.mxu0 %v297
    %375 = vmatpush2.msra.mxu0 %v296
    %376 = vmatprep.subr.mxu0 %v295
    %377 = vmatpush2.msra.mxu0 %v294
    %378 = vmatprep.subr.mxu0 %v293
    %379 = vmatpush2.msra.mxu0 %v292
    %380 = vmatprep.subr.mxu0 %v291
    %381 = vmatpush2.msra.mxu0 %v290
    %382 = vmatprep.subr.mxu0 %v289
    %383 = vmatpush2.msra.mxu0 %v288
    %384 = vmatprep.mubr.f32.mxu0 %v112
    %385 = vmatmul.mubr.f32.gmra.mxu0 %v111
    %v386 = vpop.f32.mrf.mxu0
    %v387 = vadd.f32 0.0, %v386
    %v388 = vpop.f32.mrf.mxu0
    %v389 = vadd.f32 0.0, %v388
    %390 = vmatprep.mubr.f32.mxu0 %v114
    %391 = vmatmul.mubr.f32.gmra.mxu0 %v113
    %v392 = vpop.f32.mrf.mxu0
    %v393 = vadd.f32 0.0, %v392
    %v394 = vpop.f32.mrf.mxu0
    %v395 = vadd.f32 0.0, %v394
    %396 = vdwg.mxu0
    %v397 = vsub.f32 %v107, %v111
    %v398 = vsub.f32 %v108, %v112
    %v399 = vsub.f32 %v109, %v113
    %v400 = vsub.f32 %v110, %v114
    %v401 = vld [vmem:[#allocation7] sm:$0xff]
    %v402 = vld [vmem:[#allocation7 + $0x8] sm:$0xff]
    %v403 = vld [vmem:[#allocation7 + $0x10] sm:$0xff]
    %v404 = vld [vmem:[#allocation7 + $0x18] sm:$0xff]
    %v405 = vld [vmem:[#allocation7 + $0x20] sm:$0xff]
    %v406 = vld [vmem:[#allocation7 + $0x28] sm:$0xff]
    %v407 = vld [vmem:[#allocation7 + $0x30] sm:$0xff]
    %v408 = vld [vmem:[#allocation7 + $0x38] sm:$0xff]
    %v409 = vld [vmem:[#allocation7 + $0x40] sm:$0xff]
    %v410 = vld [vmem:[#allocation7 + $0x48] sm:$0xff]
    %v411 = vld [vmem:[#allocation7 + $0x50] sm:$0xff]
    %v412 = vld [vmem:[#allocation7 + $0x58] sm:$0xff]
    %v413 = vld [vmem:[#allocation7 + $0x60] sm:$0xff]
    %v414 = vld [vmem:[#allocation7 + $0x68] sm:$0xff]
    %v415 = vld [vmem:[#allocation7 + $0x70] sm:$0xff]
    %v416 = vld [vmem:[#allocation7 + $0x78] sm:$0xff]
    %v417 = vld [vmem:[#allocation7 + $0x80] sm:$0xff]
    %v418 = vld [vmem:[#allocation7 + $0x88] sm:$0xff]
    %v419 = vld [vmem:[#allocation7 + $0x90] sm:$0xff]
    %v420 = vld [vmem:[#allocation7 + $0x98] sm:$0xff]
    %v421 = vld [vmem:[#allocation7 + $0xa0] sm:$0xff]
    %v422 = vld [vmem:[#allocation7 + $0xa8] sm:$0xff]
    %v423 = vld [vmem:[#allocation7 + $0xb0] sm:$0xff]
    %v424 = vld [vmem:[#allocation7 + $0xb8] sm:$0xff]
    %v425 = vld [vmem:[#allocation7 + $0xc0] sm:$0xff]
    %v426 = vld [vmem:[#allocation7 + $0xc8] sm:$0xff]
    %v427 = vld [vmem:[#allocation7 + $0xd0] sm:$0xff]
    %v428 = vld [vmem:[#allocation7 + $0xd8] sm:$0xff]
    %v429 = vld [vmem:[#allocation7 + $0xe0] sm:$0xff]
    %v430 = vld [vmem:[#allocation7 + $0xe8] sm:$0xff]
    %v431 = vld [vmem:[#allocation7 + $0xf0] sm:$0xff]
    %v432 = vld [vmem:[#allocation7 + $0xf8] sm:$0xff]
    %v433 = vld [vmem:[#allocation7 + $0x100] sm:$0xff]
    %v434 = vld [vmem:[#allocation7 + $0x108] sm:$0xff]
    %v435 = vld [vmem:[#allocation7 + $0x110] sm:$0xff]
    %v436 = vld [vmem:[#allocation7 + $0x118] sm:$0xff]
    %v437 = vld [vmem:[#allocation7 + $0x120] sm:$0xff]
    %v438 = vld [vmem:[#allocation7 + $0x128] sm:$0xff]
    %v439 = vld [vmem:[#allocation7 + $0x130] sm:$0xff]
    %v440 = vld [vmem:[#allocation7 + $0x138] sm:$0xff]
    %v441 = vld [vmem:[#allocation7 + $0x140] sm:$0xff]
    %v442 = vld [vmem:[#allocation7 + $0x148] sm:$0xff]
    %v443 = vld [vmem:[#allocation7 + $0x150] sm:$0xff]
    %v444 = vld [vmem:[#allocation7 + $0x158] sm:$0xff]
    %v445 = vld [vmem:[#allocation7 + $0x160] sm:$0xff]
    %v446 = vld [vmem:[#allocation7 + $0x168] sm:$0xff]
    %v447 = vld [vmem:[#allocation7 + $0x170] sm:$0xff]
    %v448 = vld [vmem:[#allocation7 + $0x178] sm:$0xff]
    %v449 = vld [vmem:[#allocation7 + $0x180] sm:$0xff]
    %v450 = vld [vmem:[#allocation7 + $0x188] sm:$0xff]
    %v451 = vld [vmem:[#allocation7 + $0x190] sm:$0xff]
    %v452 = vld [vmem:[#allocation7 + $0x198] sm:$0xff]
    %v453 = vld [vmem:[#allocation7 + $0x1a0] sm:$0xff]
    %v454 = vld [vmem:[#allocation7 + $0x1a8] sm:$0xff]
    %v455 = vld [vmem:[#allocation7 + $0x1b0] sm:$0xff]
    %v456 = vld [vmem:[#allocation7 + $0x1b8] sm:$0xff]
    %v457 = vld [vmem:[#allocation7 + $0x1c0] sm:$0xff]
    %v458 = vld [vmem:[#allocation7 + $0x1c8] sm:$0xff]
    %v459 = vld [vmem:[#allocation7 + $0x1d0] sm:$0xff]
    %v460 = vld [vmem:[#allocation7 + $0x1d8] sm:$0xff]
    %v461 = vld [vmem:[#allocation7 + $0x1e0] sm:$0xff]
    %v462 = vld [vmem:[#allocation7 + $0x1e8] sm:$0xff]
    %v463 = vld [vmem:[#allocation7 + $0x1f0] sm:$0xff]
    %v464 = vld [vmem:[#allocation7 + $0x1f8] sm:$0xff]
    %465 = vmatprep.subr.mxu0 %v432
    %466 = vmatpush1.msra.mxu0 %v431
    %467 = vmatprep.subr.mxu0 %v430
    %468 = vmatpush1.msra.mxu0 %v429
    %469 = vmatprep.subr.mxu0 %v428
    %470 = vmatpush1.msra.mxu0 %v427
    %471 = vmatprep.subr.mxu0 %v426
    %472 = vmatpush1.msra.mxu0 %v425
    %473 = vmatprep.subr.mxu0 %v424
    %474 = vmatpush1.msra.mxu0 %v423
    %475 = vmatprep.subr.mxu0 %v422
    %476 = vmatpush1.msra.mxu0 %v421
    %477 = vmatprep.subr.mxu0 %v420
    %478 = vmatpush1.msra.mxu0 %v419
    %479 = vmatprep.subr.mxu0 %v418
    %480 = vmatpush1.msra.mxu0 %v417
    %481 = vmatprep.subr.mxu0 %v416
    %482 = vmatpush1.msra.mxu0 %v415
    %483 = vmatprep.subr.mxu0 %v414
    %484 = vmatpush1.msra.mxu0 %v413
    %485 = vmatprep.subr.mxu0 %v412
    %486 = vmatpush1.msra.mxu0 %v411
    %487 = vmatprep.subr.mxu0 %v410
    %488 = vmatpush1.msra.mxu0 %v409
    %489 = vmatprep.subr.mxu0 %v408
    %490 = vmatpush1.msra.mxu0 %v407
    %491 = vmatprep.subr.mxu0 %v406
    %492 = vmatpush1.msra.mxu0 %v405
    %493 = vmatprep.subr.mxu0 %v404
    %494 = vmatpush1.msra.mxu0 %v403
    %495 = vmatprep.subr.mxu0 %v402
    %496 = vmatpush1.msra.mxu0 %v401
    %497 = vmatprep.subr.mxu0 %v464
    %498 = vmatpush2.msra.mxu0 %v463
    %499 = vmatprep.subr.mxu0 %v462
    %500 = vmatpush2.msra.mxu0 %v461
    %501 = vmatprep.subr.mxu0 %v460
    %502 = vmatpush2.msra.mxu0 %v459
    %503 = vmatprep.subr.mxu0 %v458
    %504 = vmatpush2.msra.mxu0 %v457
    %505 = vmatprep.subr.mxu0 %v456
    %506 = vmatpush2.msra.mxu0 %v455
    %507 = vmatprep.subr.mxu0 %v454
    %508 = vmatpush2.msra.mxu0 %v453
    %509 = vmatprep.subr.mxu0 %v452
    %510 = vmatpush2.msra.mxu0 %v451
    %511 = vmatprep.subr.mxu0 %v450
    %512 = vmatpush2.msra.mxu0 %v449
    %513 = vmatprep.subr.mxu0 %v448
    %514 = vmatpush2.msra.mxu0 %v447
    %515 = vmatprep.subr.mxu0 %v446
    %516 = vmatpush2.msra.mxu0 %v445
    %517 = vmatprep.subr.mxu0 %v444
    %518 = vmatpush2.msra.mxu0 %v443
    %519 = vmatprep.subr.mxu0 %v442
    %520 = vmatpush2.msra.mxu0 %v441
    %521 = vmatprep.subr.mxu0 %v440
    %522 = vmatpush2.msra.mxu0 %v439
    %523 = vmatprep.subr.mxu0 %v438
    %524 = vmatpush2.msra.mxu0 %v437
    %525 = vmatprep.subr.mxu0 %v436
    %526 = vmatpush2.msra.mxu0 %v435
    %527 = vmatprep.subr.mxu0 %v434
    %528 = vmatpush2.msra.mxu0 %v433
    %529 = vmatprep.mubr.f32.mxu0 %v398
    %530 = vmatmul.mubr.f32.gmra.mxu0 %v397
    %v531 = vpop.f32.mrf.mxu0
    %v532 = vadd.f32 0.0, %v531
    %v533 = vpop.f32.mrf.mxu0
    %v534 = vadd.f32 0.0, %v533
    %535 = vmatprep.mubr.f32.mxu0 %v400
    %536 = vmatmul.mubr.f32.gmra.mxu0 %v399
    %v537 = vpop.f32.mrf.mxu0
    %v538 = vadd.f32 0.0, %v537
    %v539 = vpop.f32.mrf.mxu0
    %v540 = vadd.f32 0.0, %v539
    %541 = vdwg.mxu0
    %v542 = vadd.f32 %v246, %v387
    %v543 = vadd.f32 %v248, %v389
    %v544 = vadd.f32 %v252, %v393
    %v545 = vadd.f32 %v254, %v395
    %v546 = vsub.f32 %v532, %v246
    %v547 = vsub.f32 %v534, %v248
    %v548 = vsub.f32 %v538, %v252
    %v549 = vsub.f32 %v540, %v254
    %v550 = vadd.f32 %v546, %v387
    %v551 = vadd.f32 %v547, %v389
    %v552 = vadd.f32 %v548, %v393
    %v553 = vadd.f32 %v549, %v395
    %v554 = vld [vmem:[#allocation8] sm:$0xff]
    %v555 = vld [vmem:[#allocation8 + $0x8] sm:$0xff]
    %v556 = vld [vmem:[#allocation8 + $0x10] sm:$0xff]
    %v557 = vld [vmem:[#allocation8 + $0x18] sm:$0xff]
    %v558 = vld [vmem:[#allocation10] sm:$0xff]
    %v559 = vld [vmem:[#allocation10 + $0x8] sm:$0xff]
    %v560 = vld [vmem:[#allocation10 + $0x10] sm:$0xff]
    %v561 = vld [vmem:[#allocation10 + $0x18] sm:$0xff]
    %v562 = vmul.f32 %v542, %v554
    %v563 = vmul.f32 %v543, %v555
    %v564 = vmul.f32 %v544, %v556
    %v565 = vmul.f32 %v545, %v557
    %v566 = vmul.f32 %v550, %v558
    %v567 = vmul.f32 %v551, %v559
    %v568 = vmul.f32 %v552, %v560
    %v569 = vmul.f32 %v553, %v561
    %v570 = vsub.f32 %v562, %v566
    %v571 = vsub.f32 %v563, %v567
    %v572 = vsub.f32 %v564, %v568
    %v573 = vsub.f32 %v565, %v569
    %v574 = vmul.f32 %v542, %v558
    %v575 = vmul.f32 %v543, %v559
    %v576 = vmul.f32 %v544, %v560
    %v577 = vmul.f32 %v545, %v561
    %v578 = vmul.f32 %v550, %v554
    %v579 = vmul.f32 %v551, %v555
    %v580 = vmul.f32 %v552, %v556
    %v581 = vmul.f32 %v553, %v557
    %v582 = vadd.f32 %v574, %v578
    %v583 = vadd.f32 %v575, %v579
    %v584 = vadd.f32 %v576, %v580
    %v585 = vadd.f32 %v577, %v581
    %v586 = vld [vmem:[%s7] sm:$0xff]
    %v587 = vld [vmem:[%s7 + $0x8] sm:$0xff]
    %v588 = vld [vmem:[%s8] sm:$0xff]
    %v589 = vld [vmem:[%s8 + $0x8] sm:$0xff]
    %v590 = vld [vmem:[%s9] sm:$0xff]
    %v591 = vld [vmem:[%s9 + $0x8] sm:$0xff]
    %v592 = vadd.f32 %v570, %v582
    %v593 = vadd.f32 %v571, %v583
    %vm594 = vcmask 64512
    %v596 = vsel %vm594, %v586, 0
    %v599 = vsel %vm594, %v587, 0
    %601 = vmatprep.subr.mxu0 0.0
    %602 = vmatpush1.msra.mxu0 0.0
    %603 = vmatprep.subr.mxu0 0.0
    %604 = vmatpush1.msra.mxu0 0.0
    %605 = vmatprep.subr.mxu0 0.0
    %606 = vmatpush1.msra.mxu0 0.0
    %607 = vmatprep.subr.mxu0 0.0
    %608 = vmatpush1.msra.mxu0 0.0
    %609 = vmatprep.subr.mxu0 0.0
    %610 = vmatpush1.msra.mxu0 0.0
    %611 = vmatprep.subr.mxu0 0.0
    %612 = vmatpush1.msra.mxu0 0.0
    %613 = vmatprep.subr.mxu0 0.0
    %614 = vmatpush1.msra.mxu0 0.0
    %615 = vmatprep.subr.mxu0 0.0
    %616 = vmatpush1.msra.mxu0 0.0
    %617 = vmatprep.subr.mxu0 0.0
    %618 = vmatpush1.msra.mxu0 0.0
    %619 = vmatprep.subr.mxu0 0.0
    %620 = vmatpush1.msra.mxu0 0.0
    %621 = vmatprep.subr.mxu0 0.0
    %622 = vmatpush1.msra.mxu0 0.0
    %623 = vmatprep.subr.mxu0 0.0
    %624 = vmatpush1.msra.mxu0 0.0
    %625 = vmatprep.subr.mxu0 0.0
    %626 = vmatpush1.msra.mxu0 0.0
    %627 = vmatprep.subr.mxu0 0.0
    %628 = vmatpush1.msra.mxu0 0.0
    %629 = vmatprep.subr.mxu0 0.0
    %630 = vmatpush1.msra.mxu0 0.0
    %631 = vmatprep.subr.mxu0 %v571
    %632 = vmatpush1.msra.mxu0 %v570
    %633 = vmatprep.subr.mxu0 0.0
    %634 = vmatpush2.msra.mxu0 0.0
    %635 = vmatprep.subr.mxu0 0.0
    %636 = vmatpush2.msra.mxu0 0.0
    %637 = vmatprep.subr.mxu0 0.0
    %638 = vmatpush2.msra.mxu0 0.0
    %639 = vmatprep.subr.mxu0 0.0
    %640 = vmatpush2.msra.mxu0 0.0
    %641 = vmatprep.subr.mxu0 0.0
    %642 = vmatpush2.msra.mxu0 0.0
    %643 = vmatprep.subr.mxu0 0.0
    %644 = vmatpush2.msra.mxu0 0.0
    %645 = vmatprep.subr.mxu0 0.0
    %646 = vmatpush2.msra.mxu0 0.0
    %647 = vmatprep.subr.mxu0 0.0
    %648 = vmatpush2.msra.mxu0 0.0
    %649 = vmatprep.subr.mxu0 0.0
    %650 = vmatpush2.msra.mxu0 0.0
    %651 = vmatprep.subr.mxu0 0.0
    %652 = vmatpush2.msra.mxu0 0.0
    %653 = vmatprep.subr.mxu0 0.0
    %654 = vmatpush2.msra.mxu0 0.0
    %655 = vmatprep.subr.mxu0 0.0
    %656 = vmatpush2.msra.mxu0 0.0
    %657 = vmatprep.subr.mxu0 0.0
    %658 = vmatpush2.msra.mxu0 0.0
    %659 = vmatprep.subr.mxu0 0.0
    %660 = vmatpush2.msra.mxu0 0.0
    %661 = vmatprep.subr.mxu0 0.0
    %662 = vmatpush2.msra.mxu0 0.0
    %663 = vmatprep.subr.mxu0 0.0
    %664 = vmatpush2.msra.mxu0 0.0
    %665 = vmatprep.mubr.f32.mxu0 0.0
    %666 = vmatmul.mubr.f32.gmra.mxu0 %v596
    %v667 = vpop.f32.mrf.mxu0
    %v668 = vadd.f32 0.0, %v667
    %v669 = vpop.f32.mrf.mxu0
    %v670 = vadd.f32 0.0, %v669
    %671 = vmatprep.mubr.f32.mxu0 0.0
    %672 = vmatmul.mubr.f32.gmra.mxu0 %v599
    %v673 = vpop.f32.mrf.mxu0
    %v674 = vadd.f32 0.0, %v673
    %v675 = vpop.f32.mrf.mxu0
    %v676 = vadd.f32 0.0, %v675
    %677 = vdwg.mxu0
    %v679 = vsel %vm594, %v588, 0
    %v682 = vsel %vm594, %v589, 0
    %684 = vmatprep.subr.mxu0 0.0
    %685 = vmatpush1.msra.mxu0 0.0
    %686 = vmatprep.subr.mxu0 0.0
    %687 = vmatpush1.msra.mxu0 0.0
    %688 = vmatprep.subr.mxu0 0.0
    %689 = vmatpush1.msra.mxu0 0.0
    %690 = vmatprep.subr.mxu0 0.0
    %691 = vmatpush1.msra.mxu0 0.0
    %692 = vmatprep.subr.mxu0 0.0
    %693 = vmatpush1.msra.mxu0 0.0
    %694 = vmatprep.subr.mxu0 0.0
    %695 = vmatpush1.msra.mxu0 0.0
    %696 = vmatprep.subr.mxu0 0.0
    %697 = vmatpush1.msra.mxu0 0.0
    %698 = vmatprep.subr.mxu0 0.0
    %699 = vmatpush1.msra.mxu0 0.0
    %700 = vmatprep.subr.mxu0 0.0
    %701 = vmatpush1.msra.mxu0 0.0
    %702 = vmatprep.subr.mxu0 0.0
    %703 = vmatpush1.msra.mxu0 0.0
    %704 = vmatprep.subr.mxu0 0.0
    %705 = vmatpush1.msra.mxu0 0.0
    %706 = vmatprep.subr.mxu0 0.0
    %707 = vmatpush1.msra.mxu0 0.0
    %708 = vmatprep.subr.mxu0 0.0
    %709 = vmatpush1.msra.mxu0 0.0
    %710 = vmatprep.subr.mxu0 0.0
    %711 = vmatpush1.msra.mxu0 0.0
    %712 = vmatprep.subr.mxu0 0.0
    %713 = vmatpush1.msra.mxu0 0.0
    %714 = vmatprep.subr.mxu0 %v583
    %715 = vmatpush1.msra.mxu0 %v582
    %716 = vmatprep.subr.mxu0 0.0
    %717 = vmatpush2.msra.mxu0 0.0
    %718 = vmatprep.subr.mxu0 0.0
    %719 = vmatpush2.msra.mxu0 0.0
    %720 = vmatprep.subr.mxu0 0.0
    %721 = vmatpush2.msra.mxu0 0.0
    %722 = vmatprep.subr.mxu0 0.0
    %723 = vmatpush2.msra.mxu0 0.0
    %724 = vmatprep.subr.mxu0 0.0
    %725 = vmatpush2.msra.mxu0 0.0
    %726 = vmatprep.subr.mxu0 0.0
    %727 = vmatpush2.msra.mxu0 0.0
    %728 = vmatprep.subr.mxu0 0.0
    %729 = vmatpush2.msra.mxu0 0.0
    %730 = vmatprep.subr.mxu0 0.0
    %731 = vmatpush2.msra.mxu0 0.0
    %732 = vmatprep.subr.mxu0 0.0
    %733 = vmatpush2.msra.mxu0 0.0
    %734 = vmatprep.subr.mxu0 0.0
    %735 = vmatpush2.msra.mxu0 0.0
    %736 = vmatprep.subr.mxu0 0.0
    %737 = vmatpush2.msra.mxu0 0.0
    %738 = vmatprep.subr.mxu0 0.0
    %739 = vmatpush2.msra.mxu0 0.0
    %740 = vmatprep.subr.mxu0 0.0
    %741 = vmatpush2.msra.mxu0 0.0
    %742 = vmatprep.subr.mxu0 0.0
    %743 = vmatpush2.msra.mxu0 0.0
    %744 = vmatprep.subr.mxu0 0.0
    %745 = vmatpush2.msra.mxu0 0.0
    %746 = vmatprep.subr.mxu0 0.0
    %747 = vmatpush2.msra.mxu0 0.0
    %748 = vmatprep.mubr.f32.mxu0 0.0
    %749 = vmatmul.mubr.f32.gmra.mxu0 %v679
    %v750 = vpop.f32.mrf.mxu0
    %v751 = vadd.f32 0.0, %v750
    %v752 = vpop.f32.mrf.mxu0
    %v753 = vadd.f32 0.0, %v752
    %754 = vmatprep.mubr.f32.mxu0 0.0
    %755 = vmatmul.mubr.f32.gmra.mxu0 %v682
    %v756 = vpop.f32.mrf.mxu0
    %v757 = vadd.f32 0.0, %v756
    %v758 = vpop.f32.mrf.mxu0
    %v759 = vadd.f32 0.0, %v758
    %760 = vdwg.mxu0
    %v762 = vsel %vm594, %v590, 0
    %v765 = vsel %vm594, %v591, 0
    %767 = vmatprep.subr.mxu0 0.0
    %768 = vmatpush1.msra.mxu0 0.0
    %769 = vmatprep.subr.mxu0 0.0
    %770 = vmatpush1.msra.mxu0 0.0
    %771 = vmatprep.subr.mxu0 0.0
    %772 = vmatpush1.msra.mxu0 0.0
    %773 = vmatprep.subr.mxu0 0.0
    %774 = vmatpush1.msra.mxu0 0.0
    %775 = vmatprep.subr.mxu0 0.0
    %776 = vmatpush1.msra.mxu0 0.0
    %777 = vmatprep.subr.mxu0 0.0
    %778 = vmatpush1.msra.mxu0 0.0
    %779 = vmatprep.subr.mxu0 0.0
    %780 = vmatpush1.msra.mxu0 0.0
    %781 = vmatprep.subr.mxu0 0.0
    %782 = vmatpush1.msra.mxu0 0.0
    %783 = vmatprep.subr.mxu0 0.0
    %784 = vmatpush1.msra.mxu0 0.0
    %785 = vmatprep.subr.mxu0 0.0
    %786 = vmatpush1.msra.mxu0 0.0
    %787 = vmatprep.subr.mxu0 0.0
    %788 = vmatpush1.msra.mxu0 0.0
    %789 = vmatprep.subr.mxu0 0.0
    %790 = vmatpush1.msra.mxu0 0.0
    %791 = vmatprep.subr.mxu0 0.0
    %792 = vmatpush1.msra.mxu0 0.0
    %793 = vmatprep.subr.mxu0 0.0
    %794 = vmatpush1.msra.mxu0 0.0
    %795 = vmatprep.subr.mxu0 0.0
    %796 = vmatpush1.msra.mxu0 0.0
    %797 = vmatprep.subr.mxu0 %v593
    %798 = vmatpush1.msra.mxu0 %v592
    %799 = vmatprep.subr.mxu0 0.0
    %800 = vmatpush2.msra.mxu0 0.0
    %801 = vmatprep.subr.mxu0 0.0
    %802 = vmatpush2.msra.mxu0 0.0
    %803 = vmatprep.subr.mxu0 0.0
    %804 = vmatpush2.msra.mxu0 0.0
    %805 = vmatprep.subr.mxu0 0.0
    %806 = vmatpush2.msra.mxu0 0.0
    %807 = vmatprep.subr.mxu0 0.0
    %808 = vmatpush2.msra.mxu0 0.0
    %809 = vmatprep.subr.mxu0 0.0
    %810 = vmatpush2.msra.mxu0 0.0
    %811 = vmatprep.subr.mxu0 0.0
    %812 = vmatpush2.msra.mxu0 0.0
    %813 = vmatprep.subr.mxu0 0.0
    %814 = vmatpush2.msra.mxu0 0.0
    %815 = vmatprep.subr.mxu0 0.0
    %816 = vmatpush2.msra.mxu0 0.0
    %817 = vmatprep.subr.mxu0 0.0
    %818 = vmatpush2.msra.mxu0 0.0
    %819 = vmatprep.subr.mxu0 0.0
    %820 = vmatpush2.msra.mxu0 0.0
    %821 = vmatprep.subr.mxu0 0.0
    %822 = vmatpush2.msra.mxu0 0.0
    %823 = vmatprep.subr.mxu0 0.0
    %824 = vmatpush2.msra.mxu0 0.0
    %825 = vmatprep.subr.mxu0 0.0
    %826 = vmatpush2.msra.mxu0 0.0
    %827 = vmatprep.subr.mxu0 0.0
    %828 = vmatpush2.msra.mxu0 0.0
    %829 = vmatprep.subr.mxu0 0.0
    %830 = vmatpush2.msra.mxu0 0.0
    %831 = vmatprep.mubr.f32.mxu0 0.0
    %832 = vmatmul.mubr.f32.gmra.mxu0 %v762
    %v833 = vpop.f32.mrf.mxu0
    %v834 = vadd.f32 0.0, %v833
    %v835 = vpop.f32.mrf.mxu0
    %v836 = vadd.f32 0.0, %v835
    %837 = vmatprep.mubr.f32.mxu0 0.0
    %838 = vmatmul.mubr.f32.gmra.mxu0 %v765
    %v839 = vpop.f32.mrf.mxu0
    %v840 = vadd.f32 0.0, %v839
    %v841 = vpop.f32.mrf.mxu0
    %v842 = vadd.f32 0.0, %v841
    %843 = vdwg.mxu0
    %v844 = vsub.f32 %v668, %v751
    %v845 = vsub.f32 %v670, %v753
    %v846 = vsub.f32 %v674, %v757
    %v847 = vsub.f32 %v676, %v759
    %848 = vst [vmem:[#allocation11] sm:$0xff] %v844
    %849 = vst [vmem:[#allocation11 + $0x8] sm:$0xff] %v845
    %850 = vst [vmem:[#allocation11 + $0x10] sm:$0xff] %v846
    %851 = vst [vmem:[#allocation11 + $0x18] sm:$0xff] %v847
    %v852 = vsub.f32 %v834, %v668
    %v853 = vsub.f32 %v836, %v670
    %v854 = vsub.f32 %v840, %v674
    %v855 = vsub.f32 %v842, %v676
    %v856 = vsub.f32 %v852, %v751
    %v857 = vsub.f32 %v853, %v753
    %v858 = vsub.f32 %v854, %v757
    %v859 = vsub.f32 %v855, %v759
    %860 = vst [vmem:[#allocation12] sm:$0xff] %v856
    %861 = vst [vmem:[#allocation12 + $0x8] sm:$0xff] %v857
    %862 = vst [vmem:[#allocation12 + $0x10] sm:$0xff] %v858
    %863 = vst [vmem:[#allocation12 + $0x18] sm:$0xff] %v859
    %v864 = vadd.f32 %v572, %v584
    %v865 = vadd.f32 %v573, %v585
    %866 = vmatprep.subr.mxu0 0.0
    %867 = vmatpush1.msra.mxu0 0.0
    %868 = vmatprep.subr.mxu0 0.0
    %869 = vmatpush1.msra.mxu0 0.0
    %870 = vmatprep.subr.mxu0 0.0
    %871 = vmatpush1.msra.mxu0 0.0
    %872 = vmatprep.subr.mxu0 0.0
    %873 = vmatpush1.msra.mxu0 0.0
    %874 = vmatprep.subr.mxu0 0.0
    %875 = vmatpush1.msra.mxu0 0.0
    %876 = vmatprep.subr.mxu0 0.0
    %877 = vmatpush1.msra.mxu0 0.0
    %878 = vmatprep.subr.mxu0 0.0
    %879 = vmatpush1.msra.mxu0 0.0
    %880 = vmatprep.subr.mxu0 0.0
    %881 = vmatpush1.msra.mxu0 0.0
    %882 = vmatprep.subr.mxu0 0.0
    %883 = vmatpush1.msra.mxu0 0.0
    %884 = vmatprep.subr.mxu0 0.0
    %885 = vmatpush1.msra.mxu0 0.0
    %886 = vmatprep.subr.mxu0 0.0
    %887 = vmatpush1.msra.mxu0 0.0
    %888 = vmatprep.subr.mxu0 0.0
    %889 = vmatpush1.msra.mxu0 0.0
    %890 = vmatprep.subr.mxu0 0.0
    %891 = vmatpush1.msra.mxu0 0.0
    %892 = vmatprep.subr.mxu0 0.0
    %893 = vmatpush1.msra.mxu0 0.0
    %894 = vmatprep.subr.mxu0 0.0
    %895 = vmatpush1.msra.mxu0 0.0
    %896 = vmatprep.subr.mxu0 %v573
    %897 = vmatpush1.msra.mxu0 %v572
    %898 = vmatprep.subr.mxu0 0.0
    %899 = vmatpush2.msra.mxu0 0.0
    %900 = vmatprep.subr.mxu0 0.0
    %901 = vmatpush2.msra.mxu0 0.0
    %902 = vmatprep.subr.mxu0 0.0
    %903 = vmatpush2.msra.mxu0 0.0
    %904 = vmatprep.subr.mxu0 0.0
    %905 = vmatpush2.msra.mxu0 0.0
    %906 = vmatprep.subr.mxu0 0.0
    %907 = vmatpush2.msra.mxu0 0.0
    %908 = vmatprep.subr.mxu0 0.0
    %909 = vmatpush2.msra.mxu0 0.0
    %910 = vmatprep.subr.mxu0 0.0
    %911 = vmatpush2.msra.mxu0 0.0
    %912 = vmatprep.subr.mxu0 0.0
    %913 = vmatpush2.msra.mxu0 0.0
    %914 = vmatprep.subr.mxu0 0.0
    %915 = vmatpush2.msra.mxu0 0.0
    %916 = vmatprep.subr.mxu0 0.0
    %917 = vmatpush2.msra.mxu0 0.0
    %918 = vmatprep.subr.mxu0 0.0
    %919 = vmatpush2.msra.mxu0 0.0
    %920 = vmatprep.subr.mxu0 0.0
    %921 = vmatpush2.msra.mxu0 0.0
    %922 = vmatprep.subr.mxu0 0.0
    %923 = vmatpush2.msra.mxu0 0.0
    %924 = vmatprep.subr.mxu0 0.0
    %925 = vmatpush2.msra.mxu0 0.0
    %926 = vmatprep.subr.mxu0 0.0
    %927 = vmatpush2.msra.mxu0 0.0
    %928 = vmatprep.subr.mxu0 0.0
    %929 = vmatpush2.msra.mxu0 0.0
    %930 = vmatprep.mubr.f32.mxu0 0.0
    %931 = vmatmul.mubr.f32.gmra.mxu0 %v596
    %v932 = vpop.f32.mrf.mxu0
    %v933 = vadd.f32 0.0, %v932
    %v934 = vpop.f32.mrf.mxu0
    %v935 = vadd.f32 0.0, %v934
    %936 = vmatprep.mubr.f32.mxu0 0.0
    %937 = vmatmul.mubr.f32.gmra.mxu0 %v599
    %v938 = vpop.f32.mrf.mxu0
    %v939 = vadd.f32 0.0, %v938
    %v940 = vpop.f32.mrf.mxu0
    %v941 = vadd.f32 0.0, %v940
    %942 = vdwg.mxu0
    %943 = vmatprep.subr.mxu0 0.0
    %944 = vmatpush1.msra.mxu0 0.0
    %945 = vmatprep.subr.mxu0 0.0
    %946 = vmatpush1.msra.mxu0 0.0
    %947 = vmatprep.subr.mxu0 0.0
    %948 = vmatpush1.msra.mxu0 0.0
    %949 = vmatprep.subr.mxu0 0.0
    %950 = vmatpush1.msra.mxu0 0.0
    %951 = vmatprep.subr.mxu0 0.0
    %952 = vmatpush1.msra.mxu0 0.0
    %953 = vmatprep.subr.mxu0 0.0
    %954 = vmatpush1.msra.mxu0 0.0
    %955 = vmatprep.subr.mxu0 0.0
    %956 = vmatpush1.msra.mxu0 0.0
    %957 = vmatprep.subr.mxu0 0.0
    %958 = vmatpush1.msra.mxu0 0.0
    %959 = vmatprep.subr.mxu0 0.0
    %960 = vmatpush1.msra.mxu0 0.0
    %961 = vmatprep.subr.mxu0 0.0
    %962 = vmatpush1.msra.mxu0 0.0
    %963 = vmatprep.subr.mxu0 0.0
    %964 = vmatpush1.msra.mxu0 0.0
    %965 = vmatprep.subr.mxu0 0.0
    %966 = vmatpush1.msra.mxu0 0.0
    %967 = vmatprep.subr.mxu0 0.0
    %968 = vmatpush1.msra.mxu0 0.0
    %969 = vmatprep.subr.mxu0 0.0
    %970 = vmatpush1.msra.mxu0 0.0
    %971 = vmatprep.subr.mxu0 0.0
    %972 = vmatpush1.msra.mxu0 0.0
    %973 = vmatprep.subr.mxu0 %v585
    %974 = vmatpush1.msra.mxu0 %v584
    %975 = vmatprep.subr.mxu0 0.0
    %976 = vmatpush2.msra.mxu0 0.0
    %977 = vmatprep.subr.mxu0 0.0
    %978 = vmatpush2.msra.mxu0 0.0
    %979 = vmatprep.subr.mxu0 0.0
    %980 = vmatpush2.msra.mxu0 0.0
    %981 = vmatprep.subr.mxu0 0.0
    %982 = vmatpush2.msra.mxu0 0.0
    %983 = vmatprep.subr.mxu0 0.0
    %984 = vmatpush2.msra.mxu0 0.0
    %985 = vmatprep.subr.mxu0 0.0
    %986 = vmatpush2.msra.mxu0 0.0
    %987 = vmatprep.subr.mxu0 0.0
    %988 = vmatpush2.msra.mxu0 0.0
    %989 = vmatprep.subr.mxu0 0.0
    %990 = vmatpush2.msra.mxu0 0.0
    %991 = vmatprep.subr.mxu0 0.0
    %992 = vmatpush2.msra.mxu0 0.0
    %993 = vmatprep.subr.mxu0 0.0
    %994 = vmatpush2.msra.mxu0 0.0
    %995 = vmatprep.subr.mxu0 0.0
    %996 = vmatpush2.msra.mxu0 0.0
    %997 = vmatprep.subr.mxu0 0.0
    %998 = vmatpush2.msra.mxu0 0.0
    %999 = vmatprep.subr.mxu0 0.0
    %1000 = vmatpush2.msra.mxu0 0.0
    %1001 = vmatprep.subr.mxu0 0.0
    %1002 = vmatpush2.msra.mxu0 0.0
    %1003 = vmatprep.subr.mxu0 0.0
    %1004 = vmatpush2.msra.mxu0 0.0
    %1005 = vmatprep.subr.mxu0 0.0
    %1006 = vmatpush2.msra.mxu0 0.0
    %1007 = vmatprep.mubr.f32.mxu0 0.0
    %1008 = vmatmul.mubr.f32.gmra.mxu0 %v679
    %v1009 = vpop.f32.mrf.mxu0
    %v1010 = vadd.f32 0.0, %v1009
    %v1011 = vpop.f32.mrf.mxu0
    %v1012 = vadd.f32 0.0, %v1011
    %1013 = vmatprep.mubr.f32.mxu0 0.0
    %1014 = vmatmul.mubr.f32.gmra.mxu0 %v682
    %v1015 = vpop.f32.mrf.mxu0
    %v1016 = vadd.f32 0.0, %v1015
    %v1017 = vpop.f32.mrf.mxu0
    %v1018 = vadd.f32 0.0, %v1017
    %1019 = vdwg.mxu0
    %1020 = vmatprep.subr.mxu0 0.0
    %1021 = vmatpush1.msra.mxu0 0.0
    %1022 = vmatprep.subr.mxu0 0.0
    %1023 = vmatpush1.msra.mxu0 0.0
    %1024 = vmatprep.subr.mxu0 0.0
    %1025 = vmatpush1.msra.mxu0 0.0
    %1026 = vmatprep.subr.mxu0 0.0
    %1027 = vmatpush1.msra.mxu0 0.0
    %1028 = vmatprep.subr.mxu0 0.0
    %1029 = vmatpush1.msra.mxu0 0.0
    %1030 = vmatprep.subr.mxu0 0.0
    %1031 = vmatpush1.msra.mxu0 0.0
    %1032 = vmatprep.subr.mxu0 0.0
    %1033 = vmatpush1.msra.mxu0 0.0
    %1034 = vmatprep.subr.mxu0 0.0
    %1035 = vmatpush1.msra.mxu0 0.0
    %1036 = vmatprep.subr.mxu0 0.0
    %1037 = vmatpush1.msra.mxu0 0.0
    %1038 = vmatprep.subr.mxu0 0.0
    %1039 = vmatpush1.msra.mxu0 0.0
    %1040 = vmatprep.subr.mxu0 0.0
    %1041 = vmatpush1.msra.mxu0 0.0
    %1042 = vmatprep.subr.mxu0 0.0
    %1043 = vmatpush1.msra.mxu0 0.0
    %1044 = vmatprep.subr.mxu0 0.0
    %1045 = vmatpush1.msra.mxu0 0.0
    %1046 = vmatprep.subr.mxu0 0.0
    %1047 = vmatpush1.msra.mxu0 0.0
    %1048 = vmatprep.subr.mxu0 0.0
    %1049 = vmatpush1.msra.mxu0 0.0
    %1050 = vmatprep.subr.mxu0 %v865
    %1051 = vmatpush1.msra.mxu0 %v864
    %1052 = vmatprep.subr.mxu0 0.0
    %1053 = vmatpush2.msra.mxu0 0.0
    %1054 = vmatprep.subr.mxu0 0.0
    %1055 = vmatpush2.msra.mxu0 0.0
    %1056 = vmatprep.subr.mxu0 0.0
    %1057 = vmatpush2.msra.mxu0 0.0
    %1058 = vmatprep.subr.mxu0 0.0
    %1059 = vmatpush2.msra.mxu0 0.0
    %1060 = vmatprep.subr.mxu0 0.0
    %1061 = vmatpush2.msra.mxu0 0.0
    %1062 = vmatprep.subr.mxu0 0.0
    %1063 = vmatpush2.msra.mxu0 0.0
    %1064 = vmatprep.subr.mxu0 0.0
    %1065 = vmatpush2.msra.mxu0 0.0
    %1066 = vmatprep.subr.mxu0 0.0
    %1067 = vmatpush2.msra.mxu0 0.0
    %1068 = vmatprep.subr.mxu0 0.0
    %1069 = vmatpush2.msra.mxu0 0.0
    %1070 = vmatprep.subr.mxu0 0.0
    %1071 = vmatpush2.msra.mxu0 0.0
    %1072 = vmatprep.subr.mxu0 0.0
    %1073 = vmatpush2.msra.mxu0 0.0
    %1074 = vmatprep.subr.mxu0 0.0
    %1075 = vmatpush2.msra.mxu0 0.0
    %1076 = vmatprep.subr.mxu0 0.0
    %1077 = vmatpush2.msra.mxu0 0.0
    %1078 = vmatprep.subr.mxu0 0.0
    %1079 = vmatpush2.msra.mxu0 0.0
    %1080 = vmatprep.subr.mxu0 0.0
    %1081 = vmatpush2.msra.mxu0 0.0
    %1082 = vmatprep.subr.mxu0 0.0
    %1083 = vmatpush2.msra.mxu0 0.0
    %1084 = vmatprep.mubr.f32.mxu0 0.0
    %1085 = vmatmul.mubr.f32.gmra.mxu0 %v762
    %v1086 = vpop.f32.mrf.mxu0
    %v1087 = vadd.f32 0.0, %v1086
    %v1088 = vpop.f32.mrf.mxu0
    %v1089 = vadd.f32 0.0, %v1088
    %1090 = vmatprep.mubr.f32.mxu0 0.0
    %1091 = vmatmul.mubr.f32.gmra.mxu0 %v765
    %v1092 = vpop.f32.mrf.mxu0
    %v1093 = vadd.f32 0.0, %v1092
    %v1094 = vpop.f32.mrf.mxu0
    %v1095 = vadd.f32 0.0, %v1094
    %1096 = vdwg.mxu0
    %v1097 = vsub.f32 %v933, %v1010
    %v1098 = vsub.f32 %v935, %v1012
    %v1099 = vsub.f32 %v939, %v1016
    %v1100 = vsub.f32 %v941, %v1018
    %1101 = vst [vmem:[#allocation11 + $0x20] sm:$0xff] %v1097
    %1102 = vst [vmem:[#allocation11 + $0x28] sm:$0xff] %v1098
    %1103 = vst [vmem:[#allocation11 + $0x30] sm:$0xff] %v1099
    %1104 = vst [vmem:[#allocation11 + $0x38] sm:$0xff] %v1100
    %v1105 = vsub.f32 %v1087, %v933
    %v1106 = vsub.f32 %v1089, %v935
    %v1107 = vsub.f32 %v1093, %v939
    %v1108 = vsub.f32 %v1095, %v941
    %v1109 = vsub.f32 %v1105, %v1010
    %v1110 = vsub.f32 %v1106, %v1012
    %v1111 = vsub.f32 %v1107, %v1016
    %v1112 = vsub.f32 %v1108, %v1018
    %1113 = vst [vmem:[#allocation12 + $0x20] sm:$0xff] %v1109
    %1114 = vst [vmem:[#allocation12 + $0x28] sm:$0xff] %v1110
    %1115 = vst [vmem:[#allocation12 + $0x30] sm:$0xff] %v1111
    %1116 = vst [vmem:[#allocation12 + $0x38] sm:$0xff] %v1112
    // Predicated region
    $region62: #{tpu_custom_call.1} parent=1 // pred_check
      _
    $region63: #{tpu_custom_call.1} parent=1 // pred_check_branch
      %1118 = sbr.rel (0) target = $region65
    $region64: #{tpu_custom_call.1} parent=1 // pred_region
      %s1120 = ssub.s32 1024, 1024
      %1121 = vsyncadd [#allocation4], %s1120
      %s1122 = sshll.u32 [#allocation11], 4
      %s1123 = int_to_ptr.vmem [resolvable:$true] %s1122
      %1128 = dma.vmem_to_hbm [thread:$0]  %s1123, 1024, %s10, [#allocation4], 256, 256, 16
    $region65: #{tpu_custom_call.1} parent=1 // pred_fallthru
      _
    // Predicated region
    $region66: #{tpu_custom_call.1} parent=1 // pred_check
      _
    $region67: #{tpu_custom_call.1} parent=1 // pred_check_branch
      %1130 = sbr.rel (0) target = $region69
    $region68: #{tpu_custom_call.1} parent=1 // pred_region
      %s1132 = ssub.s32 1024, 1024
      %1133 = vsyncadd [#allocation13], %s1132
      %s1134 = sshll.u32 [#allocation12], 4
      %s1135 = int_to_ptr.vmem [resolvable:$true] %s1134
      %1140 = dma.vmem_to_hbm [thread:$0]  %s1135, 1024, %s11, [#allocation13], 256, 256, 16
    $region69: #{tpu_custom_call.1} parent=1 // pred_fallthru
      _
    // Predicated region
    $region70: #{tpu_custom_call.1} parent=1 // pred_check
      _
    $region71: #{tpu_custom_call.1} parent=1 // pred_check_branch
      %1142 = sbr.rel (0) target = $region73
    $region72: #{tpu_custom_call.1} parent=1 // pred_region
      %1143 = dma.done [#allocation4], 1024
    $region73: #{tpu_custom_call.1} parent=1 // pred_fallthru
      _
    // Predicated region
    $region74: #{tpu_custom_call.1} parent=1 // pred_check
      _
    $region75: #{tpu_custom_call.1} parent=1 // pred_check_branch
      %1145 = sbr.rel (0) target = $region77
    $region76: #{tpu_custom_call.1} parent=1 // pred_region
      %1146 = dma.done [#allocation13], 1024
    $region77: #{tpu_custom_call.1} parent=1 // pred_fallthru
      _
    %1147 = vsyncpa [#allocation3], 1
    %1148 = vsyncpa [#allocation6], 1
    %1149 = vsyncpa [#allocation9], 1
    %1150 = vsyncpa [#allocation4], 1
    %1151 = vsyncpa [#allocation13], 1

</llo_original>
